<compile_context>
chip_gen: v7x
topology: tpu7x:2x2x1
jax: 0.10.0
libtpu: 0.0.40
codegen_flags: <defaults>
</compile_context>

<pallas_src>
import math
from functools import partial

import jax
import jax.numpy as jnp
from jax import lax
from jax.experimental import pallas as pl
from jax.experimental.pallas import tpu as pltpu

LN_EPS = 1e-5
LANE = 128


def _round_up(n, m):
    return ((n + m - 1) // m) * m


# ---------------------------------------------------------------------------
# kernel
# ---------------------------------------------------------------------------
def _intra_aggr_kernel(n_true_elems, dp, x_ref, mask_ref, w_ref, b_ref, ln_ref,
                       out_ref):
    """Fused 2-layer Intra_aggr forward for one graph (one grid step).

    x_ref   : [1, N, Dp]    f32  node features (padded cols exactly zero)
    mask_ref: [1, N, N]     int8 adjacency, mask[0, dst, src] = 1
    w_ref   : [2, Dp, 4*Dp] f32  per-layer packed [Wq*s | Wk | Wv | Wskip]
    b_ref   : [2, 1, 4*Dp]  f32  per-layer packed [bq*s | 0  | bv | bskip]
    ln_ref  : [2, 2, Dp]    f32  per-layer rows [lnw; lnb] (zero-padded cols)
    """
    x = x_ref[0]                                         # [N, Dp]
    edge_f = mask_ref[0].astype(jnp.float32)             # [N, N]
    # additive -inf bias shared by both layers (0 on edges, -1e30 off edges)
    neg_bias = (edge_f - 1.0) * jnp.float32(1e30)
    inv_count = jnp.float32(1.0 / n_true_elems)

    def one_layer(x_in, li):
        # one wide MXU matmul computes q | k | v | skip for this layer
        proj = jnp.dot(x_in, w_ref[li],
                       preferred_element_type=jnp.float32) + b_ref[li]
        q = proj[:, 0 * dp:1 * dp]
        k = proj[:, 1 * dp:2 * dp]
        v = proj[:, 2 * dp:3 * dp]
        skip = proj[:, 3 * dp:4 * dp]

        # scores[i, j] = <q_i, k_j>  (1/sqrt(D) folded into Wq/bq; bk cancels)
        scores = lax.dot_general(q, k, (((1,), (1,)), ((), ())),
                                 preferred_element_type=jnp.float32)
        masked = scores + neg_bias
        row_max = jnp.max(masked, axis=-1, keepdims=True)
        p = jnp.exp(masked - row_max) * edge_f            # off-edge -> exactly 0
        denom = jnp.sum(p, axis=-1, keepdims=True)
        denom = jnp.where(denom > 0.0, denom, jnp.float32(1.0))   # no in-edge rows
        alpha = p * pl.reciprocal(denom, approx=True)              # EUP slot
        conv = jnp.dot(alpha, v, preferred_element_type=jnp.float32) + skip

        # PyG LayerNorm(mode='graph'): stats over ALL true nodes x channels.
        # Padded columns of conv are exactly zero, so plain sums over the padded
        # tile equal sums over the true elements; divide by the true count.
        ln = ln_ref[li]                                    # [2, Dp]
        mean = jnp.sum(conv) * inv_count
        var = jnp.maximum(jnp.sum(conv * conv) * inv_count - mean * mean, 0.0)
        inv_std = 1.0 / (jnp.sqrt(var) + jnp.float32(LN_EPS))   # unbiased=False
        # lnw/lnb are zero in padded columns -> padded outputs stay exactly zero
        normed = (conv - mean) * (ln[0:1, :] * inv_std) + ln[1:2, :]
        return jnp.maximum(normed, 0.0) + x_in

    x0 = one_layer(x, 0)
    out_ref[0] = one_layer(x0, 1)


# ---------------------------------------------------------------------------
# host-side parameter packing / wrappers
# ---------------------------------------------------------------------------
def _pack_layer_params(params, d_true, d_pad):
    """Fold 1/sqrt(D) into Wq/bq, drop bk, zero-pad, pack into 3 slabs."""
    wq, bq, wk, bk, wv, bv, ws, bs, lnw, lnb = params
    del bk  # per-row constant in the logits -> cancels exactly in the softmax
    scale = 1.0 / math.sqrt(d_true)

    def pad_w(w):
        return jnp.zeros((d_pad, d_pad), jnp.float32).at[:d_true, :d_true].set(w)

    def pad_r(r):
        return jnp.zeros((1, d_pad), jnp.float32).at[:, :d_true].set(
            jnp.reshape(r, (1, -1)))

    w_all = jnp.concatenate(
        [pad_w(wq * scale), pad_w(wk), pad_w(wv), pad_w(ws)], axis=1)   # [Dp,4Dp]
    b_all = jnp.concatenate(
        [pad_r(bq * scale), jnp.zeros((1, d_pad), jnp.float32),
         pad_r(bv), pad_r(bs)], axis=1)                                 # [1,4Dp]
    # NOTE: lnw padded with ZEROS (not ones) so padded columns stay exactly zero.
    ln_all = jnp.concatenate([pad_r(lnw), pad_r(lnb)], axis=0)          # [2,Dp]
    return w_all, b_all, ln_all


def intra_aggr_forward_batched(x_b, mask_b, params0, params1):
    """x_b: [B, N, D] f32 node features; mask_b: [B, N, N] int, mask[b,dst,src]=1."""
    B, N, D = x_b.shape
    Dp = _round_up(max(D, LANE), LANE)

    x_pad = jnp.zeros((B, N, Dp), jnp.float32).at[:, :, :D].set(x_b)
    w0, b0, ln0 = _pack_layer_params(params0, D, Dp)
    w1, b1, ln1 = _pack_layer_params(params1, D, Dp)
    w_all = jnp.stack([w0, w1])          # [2, Dp, 4Dp]
    b_all = jnp.stack([b0, b1])          # [2, 1, 4Dp]
    ln_all = jnp.stack([ln0, ln1])       # [2, 2, Dp]

    out = pl.pallas_call(
        partial(_intra_aggr_kernel, float(N * D), Dp),
        out_shape=jax.ShapeDtypeStruct((B, N, Dp), jnp.float32),
        grid=(B,),
        in_specs=[
            pl.BlockSpec((1, N, Dp), lambda b: (b, 0, 0)),
            pl.BlockSpec((1, N, N), lambda b: (b, 0, 0)),
            pl.BlockSpec((2, Dp, 4 * Dp), lambda b: (0, 0, 0)),
            pl.BlockSpec((2, 1, 4 * Dp), lambda b: (0, 0, 0)),
            pl.BlockSpec((2, 2, Dp), lambda b: (0, 0, 0)),
        ],
        out_specs=pl.BlockSpec((1, N, Dp), lambda b: (b, 0, 0)),
        compiler_params=pltpu.CompilerParams(
            dimension_semantics=("parallel",),
            vmem_limit_bytes=32 * 1024 * 1024),
    )(x_pad, mask_b.astype(jnp.int8), w_all, b_all, ln_all)
    return out[:, :, :D]


def edge_index_to_mask(edge_index, num_nodes):
    """Dense int8 adjacency: mask[dst, src] = 1 (plain-JAX glue)."""
    src, dst = edge_index[0], edge_index[1]
    return jnp.zeros((num_nodes, num_nodes), jnp.int8).at[dst, src].set(1)


def intra_aggr_forward(x, edge_index, params0, params1):
    """Single-graph forward matching the PyTorch module."""
    N = x.shape[0]
    mask = edge_index_to_mask(edge_index, N)
    return intra_aggr_forward_batched(x[None], mask[None], params0, params1)[0]


def init_transformer_conv_params(key, in_dim, out_dim):
    ks = jax.random.split(key, 6)
    s = 1.0 / math.sqrt(in_dim)
    wq = jax.random.normal(ks[0], (in_dim, out_dim), jnp.float32) * s
    wk = jax.random.normal(ks[1], (in_dim, out_dim), jnp.float32) * s
    wv = jax.random.normal(ks[2], (in_dim, out_dim), jnp.float32) * s
    ws = jax.random.normal(ks[3], (in_dim, out_dim), jnp.float32) * s
    bq = jax.random.normal(ks[4], (1, out_dim), jnp.float32) * 0.01
    bk = jax.random.normal(ks[5], (1, out_dim), jnp.float32) * 0.01
    bv = jnp.zeros((1, out_dim), jnp.float32)
    bs = jnp.zeros((1, out_dim), jnp.float32)
    lnw = jnp.ones((1, out_dim), jnp.float32)   # PyG LayerNorm affine init
    lnb = jnp.zeros((1, out_dim), jnp.float32)
    return (wq, bq, wk, bk, wv, bv, ws, bs, lnw, lnb)


# ---------------------------------------------------------------------------
# plain-JAX reference (for correctness check)
# ---------------------------------------------------------------------------
def _reference_layer(x, edge, params, d_out):
    wq, bq, wk, bk, wv, bv, ws, bs, lnw, lnb = params
    q = x @ wq + bq
    k = x @ wk + bk
    v = x @ wv + bv
    scores = (q @ k.T) / math.sqrt(d_out)
    masked = jnp.where(edge, scores, -1e30)
    p = jnp.where(edge, jnp.exp(masked - masked.max(-1, keepdims=True)), 0.0)
    denom = p.sum(-1, keepdims=True)
    alpha = p / jnp.where(denom > 0.0, denom, 1.0)
    conv = alpha @ v + x @ ws + bs
    c = conv - conv.mean()
    std = jnp.sqrt((c * c).mean())
    normed = c / (std + LN_EPS) * lnw + lnb
    return jnp.maximum(normed, 0.0) + x


def _reference_forward(x, edge, params0, params1, d_out):
    x0 = _reference_layer(x, edge, params0, d_out)
    return _reference_layer(x0, edge, params1, d_out)


# ---------------------------------------------------------------------------
if __name__ == "__main__":
    B, N, D = 2, 16, 32   # batch of independent graphs, nodes, in_dim == out_dim

    key = jax.random.PRNGKey(0)
    k_x, k_p0, k_p1 = jax.random.split(key, 3)
    x_b = jax.random.normal(k_x, (B, N, D), jnp.float32)

    # deterministic edge sets: self loops + forward/backward rings (step 1 and 2)
    idx = jnp.arange(N, dtype=jnp.int32)

    def ring_edges(step):
        src = jnp.concatenate([idx, idx, idx])
        dst = jnp.concatenate([idx, (idx + step) % N, (idx - step) % N])
        return jnp.stack([src, dst], axis=0)

    mask_b = jnp.stack([edge_index_to_mask(ring_edges(1), N),
                        edge_index_to_mask(ring_edges(2), N)], axis=0)

    params0 = init_transformer_conv_params(k_p0, D, D)
    params1 = init_transformer_conv_params(k_p1, D, D)

    out = intra_aggr_forward_batched(x_b, mask_b, params0, params1)
    out = jax.block_until_ready(out)

    assert out.shape == (B, N, D)
    assert bool(jnp.all(jnp.isfinite(out)))

    # correctness vs plain-JAX reference (per-graph module semantics)
    for b in range(B):
        ref = _reference_forward(x_b[b], mask_b[b] > 0, params0, params1, D)
        assert bool(jnp.allclose(out[b], ref, atol=2e-2, rtol=2e-2)), \
            float(jnp.max(jnp.abs(out[b] - ref)))

    print("KERNEL_OK")
</pallas_src>

<mosaic_0001>
module attributes {stable_mosaic.version = 11 : i64} {
  func.func @_intra_aggr_kernel(%arg0: i32, %arg1: memref<1x16x128xf32, #tpu.memory_space<vmem>>, %arg2: memref<1x16x16xi8, #tpu.memory_space<vmem>>, %arg3: memref<2x128x512xf32, #tpu.memory_space<vmem>>, %arg4: memref<2x1x512xf32, #tpu.memory_space<vmem>>, %arg5: memref<2x2x128xf32, #tpu.memory_space<vmem>>, %arg6: memref<1x16x128xf32, #tpu.memory_space<vmem>>) attributes {dimension_semantics = [#tpu.dimension_semantics<parallel>], iteration_bounds = array<i64: 2>, scalar_prefetch = 0 : i64, scratch_operands = 0 : i64, tpu.core_type = #tpu.core_type<tc>, window_params = [{transform_indices = @transform_0, window_bounds = array<i64: 1, 16, 128>}, {transform_indices = @transform_1, window_bounds = array<i64: 1, 16, 16>}, {pipeline_mode = #tpu.pipeline_mode<synchronous>, transform_indices = @transform_2, window_bounds = array<i64: 2, 128, 512>}, {pipeline_mode = #tpu.pipeline_mode<synchronous>, transform_indices = @transform_3, window_bounds = array<i64: 2, 1, 512>}, {pipeline_mode = #tpu.pipeline_mode<synchronous>, transform_indices = @transform_4, window_bounds = array<i64: 2, 2, 128>}, {transform_indices = @transform_5, window_bounds = array<i64: 1, 16, 128>}]} {
    %c0 = arith.constant 0 : index
    %c0_0 = arith.constant 0 : index
    %c0_1 = arith.constant 0 : index
    %0 = vector.load %arg1[%c0, %c0_0, %c0_1] : memref<1x16x128xf32, #tpu.memory_space<vmem>>, vector<1x16x128xf32>
    %1 = vector.shape_cast %0 : vector<1x16x128xf32> to vector<16x128xf32>
    %c0_2 = arith.constant 0 : index
    %c0_3 = arith.constant 0 : index
    %c0_4 = arith.constant 0 : index
    %2 = vector.load %arg2[%c0_2, %c0_3, %c0_4] : memref<1x16x16xi8, #tpu.memory_space<vmem>>, vector<1x16x16xi8>
    %3 = vector.shape_cast %2 : vector<1x16x16xi8> to vector<16x16xi8>
    %4 = arith.sitofp %3 : vector<16x16xi8> to vector<16x16xf32>
    %cst = arith.constant 1.000000e+00 : f32
    %5 = vector.broadcast %cst : f32 to vector<16x16xf32>
    %6 = arith.subf %4, %5 : vector<16x16xf32>
    %cst_5 = arith.constant 1.000000e+30 : f32
    %7 = vector.broadcast %cst_5 : f32 to vector<16x16xf32>
    %8 = arith.mulf %6, %7 : vector<16x16xf32>
    %c0_6 = arith.constant 0 : index
    %c0_7 = arith.constant 0 : index
    %c0_8 = arith.constant 0 : index
    %9 = vector.load %arg3[%c0_6, %c0_7, %c0_8] : memref<2x128x512xf32, #tpu.memory_space<vmem>>, vector<1x128x512xf32>
    %10 = vector.shape_cast %9 : vector<1x128x512xf32> to vector<128x512xf32>
    %cst_9 = arith.constant dense<0.000000e+00> : vector<16x512xf32>
    %11 = tpu.matmul %1, %10, %cst_9 {dimension_numbers = #tpu.dot_dimension_numbers<[1], [0], [0], [1], [0, 0, 1, 1], [], []>} : vector<16x128xf32>, vector<128x512xf32>, vector<16x512xf32> -> vector<16x512xf32>
    %c0_10 = arith.constant 0 : index
    %c0_11 = arith.constant 0 : index
    %c0_12 = arith.constant 0 : index
    %12 = vector.load %arg4[%c0_10, %c0_11, %c0_12] : memref<2x1x512xf32, #tpu.memory_space<vmem>>, vector<1x1x512xf32>
    %13 = vector.shape_cast %12 : vector<1x1x512xf32> to vector<1x512xf32>
    %14 = vector.broadcast %13 : vector<1x512xf32> to vector<16x512xf32>
    %15 = arith.addf %11, %14 : vector<16x512xf32>
    %16 = vector.extract_strided_slice %15 {offsets = [0, 0], sizes = [16, 128], strides = [1, 1]} : vector<16x512xf32> to vector<16x128xf32>
    %17 = vector.extract_strided_slice %15 {offsets = [0, 128], sizes = [16, 128], strides = [1, 1]} : vector<16x512xf32> to vector<16x128xf32>
    %18 = vector.extract_strided_slice %15 {offsets = [0, 256], sizes = [16, 128], strides = [1, 1]} : vector<16x512xf32> to vector<16x128xf32>
    %19 = vector.extract_strided_slice %15 {offsets = [0, 384], sizes = [16, 128], strides = [1, 1]} : vector<16x512xf32> to vector<16x128xf32>
    %cst_13 = arith.constant dense<0.000000e+00> : vector<16x16xf32>
    %20 = tpu.matmul %16, %17, %cst_13 {dimension_numbers = #tpu.dot_dimension_numbers<[1], [1], [0], [0], [0, 0, 1, 0], [], []>} : vector<16x128xf32>, vector<16x128xf32>, vector<16x16xf32> -> vector<16x16xf32>
    %21 = arith.addf %20, %8 : vector<16x16xf32>
    %cst_14 = arith.constant dense<0xFF800000> : vector<16xf32>
    %22 = vector.multi_reduction <maximumf>, %21, %cst_14 [1] : vector<16x16xf32> to vector<16xf32>
    %23 = vector.shape_cast %22 : vector<16xf32> to vector<16x1xf32>
    %24 = vector.broadcast %23 : vector<16x1xf32> to vector<16x16xf32>
    %25 = arith.subf %21, %24 : vector<16x16xf32>
    %26 = math.exp %25 : vector<16x16xf32>
    %27 = arith.mulf %26, %4 : vector<16x16xf32>
    %cst_15 = arith.constant dense<0.000000e+00> : vector<16xf32>
    %28 = vector.multi_reduction <add>, %27, %cst_15 [1] : vector<16x16xf32> to vector<16xf32>
    %29 = vector.shape_cast %28 : vector<16xf32> to vector<16x1xf32>
    %cst_16 = arith.constant 0.000000e+00 : f32
    %30 = vector.broadcast %cst_16 : f32 to vector<16x1xf32>
    %31 = arith.cmpf ogt, %29, %30 : vector<16x1xf32>
    %cst_17 = arith.constant 1.000000e+00 : f32
    %32 = vector.broadcast %cst_17 : f32 to vector<16x1xf32>
    %33 = arith.select %31, %29, %32 : vector<16x1xi1>, vector<16x1xf32>
    %34 = tpu.reciprocal %33 {approx = true} : vector<16x1xf32> -> vector<16x1xf32>
    %35 = vector.broadcast %34 : vector<16x1xf32> to vector<16x16xf32>
    %36 = arith.mulf %27, %35 : vector<16x16xf32>
    %cst_18 = arith.constant dense<0.000000e+00> : vector<16x128xf32>
    %37 = tpu.matmul %36, %18, %cst_18 {dimension_numbers = #tpu.dot_dimension_numbers<[1], [0], [0], [1], [0, 0, 1, 1], [], []>} : vector<16x16xf32>, vector<16x128xf32>, vector<16x128xf32> -> vector<16x128xf32>
    %38 = arith.addf %37, %19 : vector<16x128xf32>
    %c0_19 = arith.constant 0 : index
    %c0_20 = arith.constant 0 : index
    %c0_21 = arith.constant 0 : index
    %39 = vector.load %arg5[%c0_19, %c0_20, %c0_21] : memref<2x2x128xf32, #tpu.memory_space<vmem>>, vector<1x2x128xf32>
    %40 = vector.shape_cast %39 : vector<1x2x128xf32> to vector<2x128xf32>
    %41 = vector.shape_cast %38 : vector<16x128xf32> to vector<1x16x128xf32>
    %cst_22 = arith.constant dense<0.000000e+00> : vector<1xf32>
    %42 = vector.multi_reduction <add>, %41, %cst_22 [1, 2] : vector<1x16x128xf32> to vector<1xf32>
    %43 = vector.shape_cast %42 : vector<1xf32> to vector<1x1x1xf32>
    %44 = vector.extract %43[0, 0, 0] : f32 from vector<1x1x1xf32>
    %cst_23 = arith.constant 0.001953125 : f32
    %45 = arith.mulf %44, %cst_23 : f32
    %46 = arith.mulf %38, %38 : vector<16x128xf32>
    %47 = vector.shape_cast %46 : vector<16x128xf32> to vector<1x16x128xf32>
    %cst_24 = arith.constant dense<0.000000e+00> : vector<1xf32>
    %48 = vector.multi_reduction <add>, %47, %cst_24 [1, 2] : vector<1x16x128xf32> to vector<1xf32>
    %49 = vector.shape_cast %48 : vector<1xf32> to vector<1x1x1xf32>
    %50 = vector.extract %49[0, 0, 0] : f32 from vector<1x1x1xf32>
    %cst_25 = arith.constant 0.001953125 : f32
    %51 = arith.mulf %50, %cst_25 : f32
    %52 = arith.mulf %45, %45 : f32
    %53 = arith.subf %51, %52 : f32
    %cst_26 = arith.constant 0.000000e+00 : f32
    %54 = arith.maximumf %53, %cst_26 : f32
    %55 = math.sqrt %54 : f32
    %cst_27 = arith.constant 9.99999974E-6 : f32
    %56 = arith.addf %55, %cst_27 : f32
    %cst_28 = arith.constant 1.000000e+00 : f32
    %57 = arith.divf %cst_28, %56 : f32
    %58 = vector.broadcast %45 : f32 to vector<16x128xf32>
    %59 = arith.subf %38, %58 : vector<16x128xf32>
    %60 = vector.extract_strided_slice %40 {offsets = [0, 0], sizes = [1, 128], strides = [1, 1]} : vector<2x128xf32> to vector<1x128xf32>
    %61 = vector.broadcast %57 : f32 to vector<1x128xf32>
    %62 = arith.mulf %60, %61 : vector<1x128xf32>
    %63 = vector.broadcast %62 : vector<1x128xf32> to vector<16x128xf32>
    %64 = arith.mulf %59, %63 : vector<16x128xf32>
    %65 = vector.extract_strided_slice %40 {offsets = [1, 0], sizes = [1, 128], strides = [1, 1]} : vector<2x128xf32> to vector<1x128xf32>
    %66 = vector.broadcast %65 : vector<1x128xf32> to vector<16x128xf32>
    %67 = arith.addf %64, %66 : vector<16x128xf32>
    %cst_29 = arith.constant 0.000000e+00 : f32
    %68 = vector.broadcast %cst_29 : f32 to vector<16x128xf32>
    %69 = arith.maximumf %67, %68 : vector<16x128xf32>
    %70 = arith.addf %69, %1 : vector<16x128xf32>
    %c1 = arith.constant 1 : index
    %c0_30 = arith.constant 0 : index
    %c0_31 = arith.constant 0 : index
    %71 = vector.load %arg3[%c1, %c0_30, %c0_31] : memref<2x128x512xf32, #tpu.memory_space<vmem>>, vector<1x128x512xf32>
    %72 = vector.shape_cast %71 : vector<1x128x512xf32> to vector<128x512xf32>
    %cst_32 = arith.constant dense<0.000000e+00> : vector<16x512xf32>
    %73 = tpu.matmul %70, %72, %cst_32 {dimension_numbers = #tpu.dot_dimension_numbers<[1], [0], [0], [1], [0, 0, 1, 1], [], []>} : vector<16x128xf32>, vector<128x512xf32>, vector<16x512xf32> -> vector<16x512xf32>
    %c1_33 = arith.constant 1 : index
    %c0_34 = arith.constant 0 : index
    %c0_35 = arith.constant 0 : index
    %74 = vector.load %arg4[%c1_33, %c0_34, %c0_35] : memref<2x1x512xf32, #tpu.memory_space<vmem>>, vector<1x1x512xf32>
    %75 = vector.shape_cast %74 : vector<1x1x512xf32> to vector<1x512xf32>
    %76 = vector.broadcast %75 : vector<1x512xf32> to vector<16x512xf32>
    %77 = arith.addf %73, %76 : vector<16x512xf32>
    %78 = vector.extract_strided_slice %77 {offsets = [0, 0], sizes = [16, 128], strides = [1, 1]} : vector<16x512xf32> to vector<16x128xf32>
    %79 = vector.extract_strided_slice %77 {offsets = [0, 128], sizes = [16, 128], strides = [1, 1]} : vector<16x512xf32> to vector<16x128xf32>
    %80 = vector.extract_strided_slice %77 {offsets = [0, 256], sizes = [16, 128], strides = [1, 1]} : vector<16x512xf32> to vector<16x128xf32>
    %81 = vector.extract_strided_slice %77 {offsets = [0, 384], sizes = [16, 128], strides = [1, 1]} : vector<16x512xf32> to vector<16x128xf32>
    %cst_36 = arith.constant dense<0.000000e+00> : vector<16x16xf32>
    %82 = tpu.matmul %78, %79, %cst_36 {dimension_numbers = #tpu.dot_dimension_numbers<[1], [1], [0], [0], [0, 0, 1, 0], [], []>} : vector<16x128xf32>, vector<16x128xf32>, vector<16x16xf32> -> vector<16x16xf32>
    %83 = arith.addf %82, %8 : vector<16x16xf32>
    %cst_37 = arith.constant dense<0xFF800000> : vector<16xf32>
    %84 = vector.multi_reduction <maximumf>, %83, %cst_37 [1] : vector<16x16xf32> to vector<16xf32>
    %85 = vector.shape_cast %84 : vector<16xf32> to vector<16x1xf32>
    %86 = vector.broadcast %85 : vector<16x1xf32> to vector<16x16xf32>
    %87 = arith.subf %83, %86 : vector<16x16xf32>
    %88 = math.exp %87 : vector<16x16xf32>
    %89 = arith.mulf %88, %4 : vector<16x16xf32>
    %cst_38 = arith.constant dense<0.000000e+00> : vector<16xf32>
    %90 = vector.multi_reduction <add>, %89, %cst_38 [1] : vector<16x16xf32> to vector<16xf32>
    %91 = vector.shape_cast %90 : vector<16xf32> to vector<16x1xf32>
    %cst_39 = arith.constant 0.000000e+00 : f32
    %92 = vector.broadcast %cst_39 : f32 to vector<16x1xf32>
    %93 = arith.cmpf ogt, %91, %92 : vector<16x1xf32>
    %cst_40 = arith.constant 1.000000e+00 : f32
    %94 = vector.broadcast %cst_40 : f32 to vector<16x1xf32>
    %95 = arith.select %93, %91, %94 : vector<16x1xi1>, vector<16x1xf32>
    %96 = tpu.reciprocal %95 {approx = true} : vector<16x1xf32> -> vector<16x1xf32>
    %97 = vector.broadcast %96 : vector<16x1xf32> to vector<16x16xf32>
    %98 = arith.mulf %89, %97 : vector<16x16xf32>
    %cst_41 = arith.constant dense<0.000000e+00> : vector<16x128xf32>
    %99 = tpu.matmul %98, %80, %cst_41 {dimension_numbers = #tpu.dot_dimension_numbers<[1], [0], [0], [1], [0, 0, 1, 1], [], []>} : vector<16x16xf32>, vector<16x128xf32>, vector<16x128xf32> -> vector<16x128xf32>
    %100 = arith.addf %99, %81 : vector<16x128xf32>
    %c1_42 = arith.constant 1 : index
    %c0_43 = arith.constant 0 : index
    %c0_44 = arith.constant 0 : index
    %101 = vector.load %arg5[%c1_42, %c0_43, %c0_44] : memref<2x2x128xf32, #tpu.memory_space<vmem>>, vector<1x2x128xf32>
    %102 = vector.shape_cast %101 : vector<1x2x128xf32> to vector<2x128xf32>
    %103 = vector.shape_cast %100 : vector<16x128xf32> to vector<1x16x128xf32>
    %cst_45 = arith.constant dense<0.000000e+00> : vector<1xf32>
    %104 = vector.multi_reduction <add>, %103, %cst_45 [1, 2] : vector<1x16x128xf32> to vector<1xf32>
    %105 = vector.shape_cast %104 : vector<1xf32> to vector<1x1x1xf32>
    %106 = vector.extract %105[0, 0, 0] : f32 from vector<1x1x1xf32>
    %cst_46 = arith.constant 0.001953125 : f32
    %107 = arith.mulf %106, %cst_46 : f32
    %108 = arith.mulf %100, %100 : vector<16x128xf32>
    %109 = vector.shape_cast %108 : vector<16x128xf32> to vector<1x16x128xf32>
    %cst_47 = arith.constant dense<0.000000e+00> : vector<1xf32>
    %110 = vector.multi_reduction <add>, %109, %cst_47 [1, 2] : vector<1x16x128xf32> to vector<1xf32>
    %111 = vector.shape_cast %110 : vector<1xf32> to vector<1x1x1xf32>
    %112 = vector.extract %111[0, 0, 0] : f32 from vector<1x1x1xf32>
    %cst_48 = arith.constant 0.001953125 : f32
    %113 = arith.mulf %112, %cst_48 : f32
    %114 = arith.mulf %107, %107 : f32
    %115 = arith.subf %113, %114 : f32
    %cst_49 = arith.constant 0.000000e+00 : f32
    %116 = arith.maximumf %115, %cst_49 : f32
    %117 = math.sqrt %116 : f32
    %cst_50 = arith.constant 9.99999974E-6 : f32
    %118 = arith.addf %117, %cst_50 : f32
    %cst_51 = arith.constant 1.000000e+00 : f32
    %119 = arith.divf %cst_51, %118 : f32
    %120 = vector.broadcast %107 : f32 to vector<16x128xf32>
    %121 = arith.subf %100, %120 : vector<16x128xf32>
    %122 = vector.extract_strided_slice %102 {offsets = [0, 0], sizes = [1, 128], strides = [1, 1]} : vector<2x128xf32> to vector<1x128xf32>
    %123 = vector.broadcast %119 : f32 to vector<1x128xf32>
    %124 = arith.mulf %122, %123 : vector<1x128xf32>
    %125 = vector.broadcast %124 : vector<1x128xf32> to vector<16x128xf32>
    %126 = arith.mulf %121, %125 : vector<16x128xf32>
    %127 = vector.extract_strided_slice %102 {offsets = [1, 0], sizes = [1, 128], strides = [1, 1]} : vector<2x128xf32> to vector<1x128xf32>
    %128 = vector.broadcast %127 : vector<1x128xf32> to vector<16x128xf32>
    %129 = arith.addf %126, %128 : vector<16x128xf32>
    %cst_52 = arith.constant 0.000000e+00 : f32
    %130 = vector.broadcast %cst_52 : f32 to vector<16x128xf32>
    %131 = arith.maximumf %129, %130 : vector<16x128xf32>
    %132 = arith.addf %131, %70 : vector<16x128xf32>
    %c0_53 = arith.constant 0 : index
    %c0_54 = arith.constant 0 : index
    %c0_55 = arith.constant 0 : index
    %133 = vector.load %arg6[%c0_53, %c0_54, %c0_55] : memref<1x16x128xf32, #tpu.memory_space<vmem>>, vector<1x16x128xf32>
    %134 = vector.shape_cast %133 : vector<1x16x128xf32> to vector<16x128xf32>
    %135 = vector.shape_cast %132 : vector<16x128xf32> to vector<1x16x128xf32>
    tpu.vector_store %arg6[%c0_53, %c0_54, %c0_55], %135 {strides = array<i32>} : memref<1x16x128xf32, #tpu.memory_space<vmem>>, vector<1x16x128xf32>,
    return
  }
  func.func @transform_0(%arg0: i32) -> (i32, i32, i32) {
    %c0_i32 = arith.constant 0 : i32
    %c0_i32_0 = arith.constant 0 : i32
    %c0_i32_1 = arith.constant 0 : i32
    return %arg0, %c0_i32, %c0_i32_0 : i32, i32, i32
  }
  func.func @transform_1(%arg0: i32) -> (i32, i32, i32) {
    %c0_i32 = arith.constant 0 : i32
    %c0_i32_0 = arith.constant 0 : i32
    %c0_i32_1 = arith.constant 0 : i32
    return %arg0, %c0_i32, %c0_i32_0 : i32, i32, i32
  }
  func.func @transform_2(%arg0: i32) -> (i32, i32, i32) {
    %c0_i32 = arith.constant 0 : i32
    %c0_i32_0 = arith.constant 0 : i32
    %c0_i32_1 = arith.constant 0 : i32
    %c0_i32_2 = arith.constant 0 : i32
    return %c0_i32, %c0_i32_0, %c0_i32_1 : i32, i32, i32
  }
  func.func @transform_3(%arg0: i32) -> (i32, i32, i32) {
    %c0_i32 = arith.constant 0 : i32
    %c0_i32_0 = arith.constant 0 : i32
    %c0_i32_1 = arith.constant 0 : i32
    %c0_i32_2 = arith.constant 0 : i32
    return %c0_i32, %c0_i32_0, %c0_i32_1 : i32, i32, i32
  }
  func.func @transform_4(%arg0: i32) -> (i32, i32, i32) {
    %c0_i32 = arith.constant 0 : i32
    %c0_i32_0 = arith.constant 0 : i32
    %c0_i32_1 = arith.constant 0 : i32
    %c0_i32_2 = arith.constant 0 : i32
    return %c0_i32, %c0_i32_0, %c0_i32_1 : i32, i32, i32
  }
  func.func @transform_5(%arg0: i32) -> (i32, i32, i32) {
    %c0_i32 = arith.constant 0 : i32
    %c0_i32_0 = arith.constant 0 : i32
    %c0_i32_1 = arith.constant 0 : i32
    return %arg0, %c0_i32, %c0_i32_0 : i32, i32, i32
  }
}

</mosaic_0001>

<llo_original>
// kernel: tpu_custom_call.1
$region0: #{tpu_custom_call.1}
  #allocation0 [shape = 'u32[]', space=smem, size = 0x4, offset = 0x4, fixed_abs, tag = 'smem constant byte address 0x4 - core index']
  #allocation1 [shape = 'u32[144,128]{1,0:T(1,128)}', space=vmem, size = 0x12000, scoped, tag = 'internal scratch']
  %s0 = inlined_call_operand.hbm [shape: f32[2,16,128], index: 0, kind: input, shape index: {}]
  %s1 = inlined_call_operand.hbm [shape: s8[2,16,16], index: 1, kind: input, shape index: {}]
  %s2 = inlined_call_operand.hbm [shape: f32[2,128,512], index: 2, kind: input, shape index: {}]
  %s3 = inlined_call_operand.vmem [shape: f32[2,1,512], index: 3, kind: input, shape index: {}]
  %s4 = inlined_call_operand.vmem [shape: f32[2,2,128], index: 4, kind: input, shape index: {}]
  %s5 = inlined_call_operand.hbm [shape: f32[2,16,128], index: 5, kind: output, shape index: {}]
  %s6 = sld [smem:[#allocation0]]
  $region65: #{tpu_custom_call.1} parent=0
    _
  %s8 = ssub.s32 1, %s6
  %s9 = scalar_select 0, %s8, %s6
  $region1: #{tpu_custom_call.1} parent=0
    #allocation2 [shape = 'u8[16384]{0}', space=vmem, size = 0x4000, scoped, tag = 'input window, operand 0']
    #allocation3 [shape = 's32[2]{0}', space=sflag, size = 0x8, scoped, tag = 'scoped memory for tpu_custom_call.1']
    #allocation4 [shape = 's32[2]{0}', space=sflag, size = 0x8, scoped, tag = 'scoped memory for tpu_custom_call.1']
    #allocation5 [shape = 'u8[4096]{0}', space=vmem, size = 0x1000, scoped, tag = 'input window, operand 1']
    #allocation6 [shape = 's32[2]{0}', space=sflag, size = 0x8, scoped, tag = 'scoped memory for tpu_custom_call.1']
    #allocation7 [shape = 'u8[524288]{0}', space=vmem, size = 0x80000, scoped, tag = 'input window, operand 2, single buffered']
    #allocation8 [shape = 'u8[16384]{0}', space=vmem, size = 0x4000, scoped, tag = 'output window, operand 0']
    %10 = vsyncpa [#allocation3], 0
    %s11 = scalar_lea.sflag [#allocation3], 1
    %12 = vsyncpa %s11, 0
    %13 = vsyncpa [#allocation6], 0
    %s14 = scalar_lea.sflag [#allocation6], 1
    %15 = vsyncpa %s14, 0
    %16 = vsyncpa [#allocation4], 0
    %s17 = scalar_lea.sflag [#allocation4], 1
    %18 = vsyncpa %s17, 0
    loop: start=0, step=1, limit=4
    $region2: #{tpu_custom_call.1} parent=1 // loop_pre_header
      _
    $region3: #{tpu_custom_call.1} parent=1 // loop_header
      %s20 = sphi 0, %s24
      %p21 = scmp.ge.s32.totalorder %s20, 4
      %s30 = sphi 0, %s32
      %s33 = sphi 0, %s30
      %s34 = sphi 0, %s33
      %s50 = sphi 0, %s34
      %s56 = sphi 0, %s58
      %s59 = sphi 0, %s56
      %s60 = sphi 0, %s59
      %s76 = sphi 0, %s60
      %s80 = sphi 0, %s80
      %s82 = sphi 0, %s80
      %s83 = sphi 0, %s82
      %s97 = sphi 0, %s83
      %s101 = sphi 0, %s101
      %s103 = sphi 0, %s101
      %s104 = sphi 0, %s103
      %s118 = sphi 0, %s104
      %s122 = sphi 0, %s122
      %s124 = sphi 0, %s122
      %s125 = sphi 0, %s124
      %s139 = sphi 0, %s125
      %s145 = sphi 0, %s147
      %s148 = sphi 0, %s145
      %s149 = sphi 0, %s148
      %s165 = sphi 0, %s149
    $region4: #{tpu_custom_call.1} parent=1 // loop_header_branch
      %23 = sbr.rel (%p21) target = $region8
    $region5: #{tpu_custom_call.1} parent=1 // loop_body
      %s25 = ssub.s32 %s20, 1
      %s26 = ssub.s32 %s20, 2
      %s27 = sadd.s32 %s20, 1
      %s28 = ssub.s32 %s20, %s27
      %p29 = scmp.eq.s32.totalorder %s28, 0
      %s31 = sadd.s32 %s30, 1
      %s32 = scalar_select %p29, %s30, %s31
      %p35 = pneg %p29
      %p36 = scmp.eq.s32.totalorder %s20, 1
      %p37 = por %p35, %p36
      %p38 = scmp.ne.s32.totalorder %s30, %s33
      %p39 = scmp.eq.s32.totalorder %s20, 0
      %p40 = por %p38, %p39
      %p41 = scmp.ne.s32.totalorder %s30, %s33
      %p42 = scmp.eq.s32.totalorder %s25, 1
      %p43 = por %p41, %p42
      %p44 = scmp.ne.s32.totalorder %s33, %s34
      %p45 = scmp.eq.s32.totalorder %s25, 0
      %p46 = por %p44, %p45
      %p47 = scmp.ne.s32.totalorder %s33, %s34
      %p48 = scmp.eq.s32.totalorder %s26, 1
      %p49 = por %p47, %p48
      %p51 = scmp.ne.s32.totalorder %s34, %s50
      %p52 = scmp.eq.s32.totalorder %s26, 0
      %p53 = por %p51, %p52
      %s54 = ssub.s32 %s20, %s27
      %p55 = scmp.eq.s32.totalorder %s54, 0
      %s57 = sadd.s32 %s56, 1
      %s58 = scalar_select %p55, %s56, %s57
      %p61 = pneg %p55
      %p62 = scmp.eq.s32.totalorder %s20, 1
      %p63 = por %p61, %p62
      %p64 = scmp.ne.s32.totalorder %s56, %s59
      %p65 = scmp.eq.s32.totalorder %s20, 0
      %p66 = por %p64, %p65
      %p67 = scmp.ne.s32.totalorder %s56, %s59
      %p68 = scmp.eq.s32.totalorder %s25, 1
      %p69 = por %p67, %p68
      %p70 = scmp.ne.s32.totalorder %s59, %s60
      %p71 = scmp.eq.s32.totalorder %s25, 0
      %p72 = por %p70, %p71
      %p73 = scmp.ne.s32.totalorder %s59, %s60
      %p74 = scmp.eq.s32.totalorder %s26, 1
      %p75 = por %p73, %p74
      %p77 = scmp.ne.s32.totalorder %s60, %s76
      %p78 = scmp.eq.s32.totalorder %s26, 0
      %p79 = por %p77, %p78
      %s81 = sadd.s32 %s80, 1
      %p84 = scmp.eq.s32.totalorder %s20, 1
      %p85 = scmp.ne.s32.totalorder %s80, %s82
      %p86 = scmp.eq.s32.totalorder %s20, 0
      %p87 = por %p85, %p86
      %p88 = scmp.ne.s32.totalorder %s80, %s82
      %p89 = scmp.eq.s32.totalorder %s25, 1
      %p90 = por %p88, %p89
      %p91 = scmp.ne.s32.totalorder %s82, %s83
      %p92 = scmp.eq.s32.totalorder %s25, 0
      %p93 = por %p91, %p92
      %p94 = scmp.ne.s32.totalorder %s82, %s83
      %p95 = scmp.eq.s32.totalorder %s26, 1
      %p96 = por %p94, %p95
      %p98 = scmp.ne.s32.totalorder %s83, %s97
      %p99 = scmp.eq.s32.totalorder %s26, 0
      %p100 = por %p98, %p99
      %s102 = sadd.s32 %s101, 1
      %p105 = scmp.eq.s32.totalorder %s20, 1
      %p106 = scmp.ne.s32.totalorder %s101, %s103
      %p107 = scmp.eq.s32.totalorder %s20, 0
      %p108 = por %p106, %p107
      %p109 = scmp.ne.s32.totalorder %s101, %s103
      %p110 = scmp.eq.s32.totalorder %s25, 1
      %p111 = por %p109, %p110
      %p112 = scmp.ne.s32.totalorder %s103, %s104
      %p113 = scmp.eq.s32.totalorder %s25, 0
      %p114 = por %p112, %p113
      %p115 = scmp.ne.s32.totalorder %s103, %s104
      %p116 = scmp.eq.s32.totalorder %s26, 1
      %p117 = por %p115, %p116
      %p119 = scmp.ne.s32.totalorder %s104, %s118
      %p120 = scmp.eq.s32.totalorder %s26, 0
      %p121 = por %p119, %p120
      %s123 = sadd.s32 %s122, 1
      %p126 = scmp.eq.s32.totalorder %s20, 1
      %p127 = scmp.ne.s32.totalorder %s122, %s124
      %p128 = scmp.eq.s32.totalorder %s20, 0
      %p129 = por %p127, %p128
      %p130 = scmp.ne.s32.totalorder %s122, %s124
      %p131 = scmp.eq.s32.totalorder %s25, 1
      %p132 = por %p130, %p131
      %p133 = scmp.ne.s32.totalorder %s124, %s125
      %p134 = scmp.eq.s32.totalorder %s25, 0
      %p135 = por %p133, %p134
      %p136 = scmp.ne.s32.totalorder %s124, %s125
      %p137 = scmp.eq.s32.totalorder %s26, 1
      %p138 = por %p136, %p137
      %p140 = scmp.ne.s32.totalorder %s125, %s139
      %p141 = scmp.eq.s32.totalorder %s26, 0
      %p142 = por %p140, %p141
      %s143 = ssub.s32 %s20, %s27
      %p144 = scmp.eq.s32.totalorder %s143, 0
      %s146 = sadd.s32 %s145, 1
      %s147 = scalar_select %p144, %s145, %s146
      %p150 = pneg %p144
      %p151 = scmp.eq.s32.totalorder %s20, 1
      %p152 = por %p150, %p151
      %p153 = scmp.ne.s32.totalorder %s145, %s148
      %p154 = scmp.eq.s32.totalorder %s20, 0
      %p155 = por %p153, %p154
      %p156 = scmp.ne.s32.totalorder %s145, %s148
      %p157 = scmp.eq.s32.totalorder %s25, 1
      %p158 = por %p156, %p157
      %p159 = scmp.ne.s32.totalorder %s148, %s149
      %p160 = scmp.eq.s32.totalorder %s25, 0
      %p161 = por %p159, %p160
      %p162 = scmp.ne.s32.totalorder %s148, %s149
      %p163 = scmp.eq.s32.totalorder %s26, 1
      %p164 = por %p162, %p163
      %p166 = scmp.ne.s32.totalorder %s149, %s165
      %p167 = scmp.eq.s32.totalorder %s26, 0
      %p168 = por %p166, %p167
      %p169 = scmp.le.s32.totalorder 1, %s20
      %p170 = scmp.lt.s32.totalorder %s20, 3
      %p171 = pnand %p169, %p170
      %p172 = pneg %p171
      // Predicated region
      $region9: #{tpu_custom_call.1} parent=5 // pred_check
        _
      $region10: #{tpu_custom_call.1} parent=5 // pred_check_branch
        %174 = sbr.rel (%p171) target = $region12
      $region11: #{tpu_custom_call.1} parent=5 // pred_region
        %s175 = ssub.s32 %s20, 1
        // Predicated region
        $region13: #{tpu_custom_call.1} parent=11 // pred_check
          %p176 = pneg %p93
        $region14: #{tpu_custom_call.1} parent=11 // pred_check_branch
          %178 = sbr.rel (%p176) target = $region16
        $region15: #{tpu_custom_call.1} parent=11 // pred_region
          %s180 = ssub.s32 16384, 16384
          %181 = vsyncadd [#allocation6], %s180
          %s182 = sshll.u32 [#allocation7], 4
          %s183 = int_to_ptr.vmem [resolvable:$true] %s182
          %188 = dma.hbm_to_vmem [thread:$0]  %s2, 16384, %s183, [#allocation6], 512, 512, 32
        $region16: #{tpu_custom_call.1} parent=11 // pred_fallthru
          _
        // Predicated region
        $region17: #{tpu_custom_call.1} parent=11 // pred_check
          %p189 = pneg %p114
        $region18: #{tpu_custom_call.1} parent=11 // pred_check_branch
          %191 = sbr.rel (%p189) target = $region20
        $region19: #{tpu_custom_call.1} parent=11 // pred_region
          _
        $region20: #{tpu_custom_call.1} parent=11 // pred_fallthru
          _
        // Predicated region
        $region21: #{tpu_custom_call.1} parent=11 // pred_check
          %p192 = pneg %p135
        $region22: #{tpu_custom_call.1} parent=11 // pred_check_branch
          %194 = sbr.rel (%p192) target = $region24
        $region23: #{tpu_custom_call.1} parent=11 // pred_region
          _
        $region24: #{tpu_custom_call.1} parent=11 // pred_fallthru
          _
      $region12: #{tpu_custom_call.1} parent=5 // pred_fallthru
        _
      %p195 = scmp.lt.s32.totalorder %s20, 2
      // Predicated region
      $region25: #{tpu_custom_call.1} parent=5 // pred_check
        %p196 = pneg %p195
      $region26: #{tpu_custom_call.1} parent=5 // pred_check_branch
        %198 = sbr.rel (%p196) target = $region28
      $region27: #{tpu_custom_call.1} parent=5 // pred_region
        // Predicated region
        $region29: #{tpu_custom_call.1} parent=27 // pred_check
          %p199 = pneg %p40
        $region30: #{tpu_custom_call.1} parent=27 // pred_check_branch
          %201 = sbr.rel (%p199) target = $region32
        $region31: #{tpu_custom_call.1} parent=27 // pred_region
          %s202 = sand.u32 %s30, 1
          %s203 = scalar_lea.sflag [#allocation3], %s202
          %s204 = sand.u32 %s30, 1
          %s205 = smul.addr %s204, 16
          %s206 = scalar_lea.vmem [#allocation2], %s205
          %s208 = ssub.s32 256, 256
          %209 = vsyncadd %s203, %s208
          %s210 = smul.addr %s20, 2
          %s211 = smul.addr %s210, 128
          %s212 = scalar_lea.hbm %s0, %s211
          %s213 = sshll.u32 %s206, 4
          %s214 = int_to_ptr.vmem [resolvable:$true] %s213
          %219 = dma.hbm_to_vmem [thread:$0]  %s212, 256, %s214, %s203, 128, 128, 8
        $region32: #{tpu_custom_call.1} parent=27 // pred_fallthru
          _
        // Predicated region
        $region33: #{tpu_custom_call.1} parent=27 // pred_check
          %p220 = pneg %p66
        $region34: #{tpu_custom_call.1} parent=27 // pred_check_branch
          %222 = sbr.rel (%p220) target = $region36
        $region35: #{tpu_custom_call.1} parent=27 // pred_region
          %s223 = sand.u32 %s20, 1
          %s224 = scalar_lea.sflag [#allocation6], %s223
          %s225 = sand.u32 %s56, 1
          %s226 = smul.addr %s225, 4
          %s227 = scalar_lea.vmem [#allocation5], %s226
          %s229 = ssub.s32 64, 64
          %230 = vsyncadd %s224, %s229
          %s231 = smul.addr %s20, 2
          %s232 = smul.addr %s231, 32
          %s233 = scalar_lea.hbm %s1, %s232
          %s234 = sshll.u32 %s227, 4
          %s235 = int_to_ptr.vmem [resolvable:$true] %s234
          %240 = dma.hbm_to_vmem [thread:$0]  %s233, 64, %s235, %s224, 32, 32, 2
        $region36: #{tpu_custom_call.1} parent=27 // pred_fallthru
          _
      $region28: #{tpu_custom_call.1} parent=5 // pred_fallthru
        _
      %p241 = scmp.le.s32.totalorder 1, %s20
      %p242 = scmp.lt.s32.totalorder %s20, 3
      %p243 = pnand %p241, %p242
      %p244 = pneg %p243
      // Predicated region
      $region37: #{tpu_custom_call.1} parent=5 // pred_check
        _
      $region38: #{tpu_custom_call.1} parent=5 // pred_check_branch
        %246 = sbr.rel (%p243) target = $region40
      $region39: #{tpu_custom_call.1} parent=5 // pred_region
        %s247 = ssub.s32 %s20, 1
        %s248 = sand.u32 %s33, 1
        %s249 = scalar_lea.sflag [#allocation3], %s248
        %s250 = sand.u32 %s33, 1
        %s251 = smul.addr %s250, 16
        %s252 = scalar_lea.vmem [#allocation2], %s251
        // Predicated region
        $region41: #{tpu_custom_call.1} parent=39 // pred_check
          %p253 = pneg %p46
        $region42: #{tpu_custom_call.1} parent=39 // pred_check_branch
          %255 = sbr.rel (%p253) target = $region44
        $region43: #{tpu_custom_call.1} parent=39 // pred_region
          %256 = dma.done %s249, 256
        $region44: #{tpu_custom_call.1} parent=39 // pred_fallthru
          _
        %s257 = sand.u32 %s25, 1
        %s258 = scalar_lea.sflag [#allocation6], %s257
        %s259 = sand.u32 %s59, 1
        %s260 = smul.addr %s259, 4
        %s261 = scalar_lea.vmem [#allocation5], %s260
        // Predicated region
        $region45: #{tpu_custom_call.1} parent=39 // pred_check
          %p262 = pneg %p72
        $region46: #{tpu_custom_call.1} parent=39 // pred_check_branch
          %264 = sbr.rel (%p262) target = $region48
        $region47: #{tpu_custom_call.1} parent=39 // pred_region
          %265 = dma.done %s258, 64
        $region48: #{tpu_custom_call.1} parent=39 // pred_fallthru
          _
        // Predicated region
        $region49: #{tpu_custom_call.1} parent=39 // pred_check
          %p266 = pneg %p93
        $region50: #{tpu_custom_call.1} parent=39 // pred_check_branch
          %268 = sbr.rel (%p266) target = $region52
        $region51: #{tpu_custom_call.1} parent=39 // pred_region
          %269 = dma.done [#allocation6], 16384
        $region52: #{tpu_custom_call.1} parent=39 // pred_fallthru
          _
        %s270 = sand.u32 %s33, 1
        %s271 = scalar_lea.sflag [#allocation3], %s270
        %s272 = sand.u32 %s33, 1
        %s273 = smul.addr %s272, 16
        %s274 = scalar_lea.vmem [#allocation2], %s273
        %p275 = pneg %p46
        %p276 = pneg %p43
        %s277 = sand.u32 %s25, 1
        %s278 = scalar_lea.sflag [#allocation6], %s277
        %s279 = sand.u32 %s59, 1
        %s280 = smul.addr %s279, 4
        %s281 = scalar_lea.vmem [#allocation5], %s280
        %p282 = pneg %p72
        %p283 = pneg %p69
        %p284 = pneg %p93
        %p285 = pneg %p90
        %p286 = pneg %p114
        %p287 = pneg %p111
        %p288 = pneg %p135
        %p289 = pneg %p132
        %p290 = pneg %p161
        %p291 = pneg %p158
        %s292 = sand.u32 %s148, 1
        %s293 = scalar_lea.sflag [#allocation4], %s292
        %s294 = sand.u32 %s148, 1
        %s295 = smul.addr %s294, 16
        %s296 = scalar_lea.vmem [#allocation8], %s295
        %v297 = vld [vmem:[%s252] sm:$0xff]
        %v298 = vld [vmem:[%s252 + $0x8] sm:$0xff]
        %v299 = vld [vmem:[%s261] sm:$0x3]
        %v300 = vld [vmem:[%s261 + $0x2] sm:$0x3]
        %v301 = vunpack.c.0.s8 %v299
        %v302 = vunpack.c.0.s8 %v300
        %v303 = vcvt.s32.f32 %v301
        %v304 = vcvt.s32.f32 %v302
        %v305 = vsub.f32 %v303, 1.0
        %v306 = vsub.f32 %v304, 1.0
        %v307 = vmul.f32 %v305, 1e+30
        %v308 = vmul.f32 %v306, 1e+30
        %v309 = vld [vmem:[#allocation7] sm:$0xff]
        %v310 = vld [vmem:[#allocation7 + $0x8] sm:$0xff]
        %v311 = vld [vmem:[#allocation7 + $0x10] sm:$0xff]
        %v312 = vld [vmem:[#allocation7 + $0x18] sm:$0xff]
        %v313 = vld [vmem:[#allocation7 + $0x20] sm:$0xff]
        %v314 = vld [vmem:[#allocation7 + $0x28] sm:$0xff]
        %v315 = vld [vmem:[#allocation7 + $0x30] sm:$0xff]
        %v316 = vld [vmem:[#allocation7 + $0x38] sm:$0xff]
        %v317 = vld [vmem:[#allocation7 + $0x40] sm:$0xff]
        %v318 = vld [vmem:[#allocation7 + $0x48] sm:$0xff]
        %v319 = vld [vmem:[#allocation7 + $0x50] sm:$0xff]
        %v320 = vld [vmem:[#allocation7 + $0x58] sm:$0xff]
        %v321 = vld [vmem:[#allocation7 + $0x60] sm:$0xff]
        %v322 = vld [vmem:[#allocation7 + $0x68] sm:$0xff]
        %v323 = vld [vmem:[#allocation7 + $0x70] sm:$0xff]
        %v324 = vld [vmem:[#allocation7 + $0x78] sm:$0xff]
        %v325 = vld [vmem:[#allocation7 + $0x80] sm:$0xff]
        %v326 = vld [vmem:[#allocation7 + $0x88] sm:$0xff]
        %v327 = vld [vmem:[#allocation7 + $0x90] sm:$0xff]
        %v328 = vld [vmem:[#allocation7 + $0x98] sm:$0xff]
        %v329 = vld [vmem:[#allocation7 + $0xa0] sm:$0xff]
        %v330 = vld [vmem:[#allocation7 + $0xa8] sm:$0xff]
        %v331 = vld [vmem:[#allocation7 + $0xb0] sm:$0xff]
        %v332 = vld [vmem:[#allocation7 + $0xb8] sm:$0xff]
        %v333 = vld [vmem:[#allocation7 + $0xc0] sm:$0xff]
        %v334 = vld [vmem:[#allocation7 + $0xc8] sm:$0xff]
        %v335 = vld [vmem:[#allocation7 + $0xd0] sm:$0xff]
        %v336 = vld [vmem:[#allocation7 + $0xd8] sm:$0xff]
        %v337 = vld [vmem:[#allocation7 + $0xe0] sm:$0xff]
        %v338 = vld [vmem:[#allocation7 + $0xe8] sm:$0xff]
        %v339 = vld [vmem:[#allocation7 + $0xf0] sm:$0xff]
        %v340 = vld [vmem:[#allocation7 + $0xf8] sm:$0xff]
        %v341 = vld [vmem:[#allocation7 + $0x100] sm:$0xff]
        %v342 = vld [vmem:[#allocation7 + $0x108] sm:$0xff]
        %v343 = vld [vmem:[#allocation7 + $0x110] sm:$0xff]
        %v344 = vld [vmem:[#allocation7 + $0x118] sm:$0xff]
        %v345 = vld [vmem:[#allocation7 + $0x120] sm:$0xff]
        %v346 = vld [vmem:[#allocation7 + $0x128] sm:$0xff]
        %v347 = vld [vmem:[#allocation7 + $0x130] sm:$0xff]
        %v348 = vld [vmem:[#allocation7 + $0x138] sm:$0xff]
        %v349 = vld [vmem:[#allocation7 + $0x140] sm:$0xff]
        %v350 = vld [vmem:[#allocation7 + $0x148] sm:$0xff]
        %v351 = vld [vmem:[#allocation7 + $0x150] sm:$0xff]
        %v352 = vld [vmem:[#allocation7 + $0x158] sm:$0xff]
        %v353 = vld [vmem:[#allocation7 + $0x160] sm:$0xff]
        %v354 = vld [vmem:[#allocation7 + $0x168] sm:$0xff]
        %v355 = vld [vmem:[#allocation7 + $0x170] sm:$0xff]
        %v356 = vld [vmem:[#allocation7 + $0x178] sm:$0xff]
        %v357 = vld [vmem:[#allocation7 + $0x180] sm:$0xff]
        %v358 = vld [vmem:[#allocation7 + $0x188] sm:$0xff]
        %v359 = vld [vmem:[#allocation7 + $0x190] sm:$0xff]
        %v360 = vld [vmem:[#allocation7 + $0x198] sm:$0xff]
        %v361 = vld [vmem:[#allocation7 + $0x1a0] sm:$0xff]
        %v362 = vld [vmem:[#allocation7 + $0x1a8] sm:$0xff]
        %v363 = vld [vmem:[#allocation7 + $0x1b0] sm:$0xff]
        %v364 = vld [vmem:[#allocation7 + $0x1b8] sm:$0xff]
        %v365 = vld [vmem:[#allocation7 + $0x1c0] sm:$0xff]
        %v366 = vld [vmem:[#allocation7 + $0x1c8] sm:$0xff]
        %v367 = vld [vmem:[#allocation7 + $0x1d0] sm:$0xff]
        %v368 = vld [vmem:[#allocation7 + $0x1d8] sm:$0xff]
        %v369 = vld [vmem:[#allocation7 + $0x1e0] sm:$0xff]
        %v370 = vld [vmem:[#allocation7 + $0x1e8] sm:$0xff]
        %v371 = vld [vmem:[#allocation7 + $0x1f0] sm:$0xff]
        %v372 = vld [vmem:[#allocation7 + $0x1f8] sm:$0xff]
        %v373 = vld [vmem:[%s3] sm:$0xf]
        %v375 = vlaneseq
        %v376 = vshrl.u32 %v375, 7
        %v377 = vsub.s32 0, %v376
        %v378 = vrot.slane %v373, %v377
        %v379 = vlaneseq
        %v380 = vshrl.u32 %v379, 7
        %v381 = vsub.s32 1, %v380
        %v382 = vrot.slane %v373, %v381
        %v383 = vlaneseq
        %v384 = vshrl.u32 %v383, 7
        %v385 = vsub.s32 2, %v384
        %v386 = vrot.slane %v373, %v385
        %v387 = vlaneseq
        %v388 = vshrl.u32 %v387, 7
        %v389 = vsub.s32 3, %v388
        %v390 = vrot.slane %v373, %v389
        %395 = vmatprep.subr.mxu0 %v310
        %396 = vmatpush1.msra.mxu0 %v309
        %397 = vmatprep.subr.mxu0 %v314
        %398 = vmatpush1.msra.mxu0 %v313
        %399 = vmatprep.subr.mxu0 %v318
        %400 = vmatpush1.msra.mxu0 %v317
        %401 = vmatprep.subr.mxu0 %v322
        %402 = vmatpush1.msra.mxu0 %v321
        %403 = vmatprep.subr.mxu0 %v326
        %404 = vmatpush1.msra.mxu0 %v325
        %405 = vmatprep.subr.mxu0 %v330
        %406 = vmatpush1.msra.mxu0 %v329
        %407 = vmatprep.subr.mxu0 %v334
        %408 = vmatpush1.msra.mxu0 %v333
        %409 = vmatprep.subr.mxu0 %v338
        %410 = vmatpush1.msra.mxu0 %v337
        %411 = vmatprep.subr.mxu0 %v342
        %412 = vmatpush1.msra.mxu0 %v341
        %413 = vmatprep.subr.mxu0 %v346
        %414 = vmatpush1.msra.mxu0 %v345
        %415 = vmatprep.subr.mxu0 %v350
        %416 = vmatpush1.msra.mxu0 %v349
        %417 = vmatprep.subr.mxu0 %v354
        %418 = vmatpush1.msra.mxu0 %v353
        %419 = vmatprep.subr.mxu0 %v358
        %420 = vmatpush1.msra.mxu0 %v357
        %421 = vmatprep.subr.mxu0 %v362
        %422 = vmatpush1.msra.mxu0 %v361
        %423 = vmatprep.subr.mxu0 %v366
        %424 = vmatpush1.msra.mxu0 %v365
        %425 = vmatprep.subr.mxu0 %v370
        %426 = vmatpush1.msra.mxu0 %v369
        %427 = vmatprep.subr.mxu0 0.0
        %428 = vmatpush1.msra.mxu0 0.0
        %429 = vmatprep.subr.mxu0 0.0
        %430 = vmatpush1.msra.mxu0 0.0
        %431 = vmatprep.subr.mxu0 0.0
        %432 = vmatpush1.msra.mxu0 0.0
        %433 = vmatprep.subr.mxu0 0.0
        %434 = vmatpush1.msra.mxu0 0.0
        %435 = vmatprep.subr.mxu0 0.0
        %436 = vmatpush1.msra.mxu0 0.0
        %437 = vmatprep.subr.mxu0 0.0
        %438 = vmatpush1.msra.mxu0 0.0
        %439 = vmatprep.subr.mxu0 0.0
        %440 = vmatpush1.msra.mxu0 0.0
        %441 = vmatprep.subr.mxu0 0.0
        %442 = vmatpush1.msra.mxu0 0.0
        %443 = vmatprep.subr.mxu0 0.0
        %444 = vmatpush1.msra.mxu0 0.0
        %445 = vmatprep.subr.mxu0 0.0
        %446 = vmatpush1.msra.mxu0 0.0
        %447 = vmatprep.subr.mxu0 0.0
        %448 = vmatpush1.msra.mxu0 0.0
        %449 = vmatprep.subr.mxu0 0.0
        %450 = vmatpush1.msra.mxu0 0.0
        %451 = vmatprep.subr.mxu0 0.0
        %452 = vmatpush1.msra.mxu0 0.0
        %453 = vmatprep.subr.mxu0 0.0
        %454 = vmatpush1.msra.mxu0 0.0
        %455 = vmatprep.subr.mxu0 0.0
        %456 = vmatpush1.msra.mxu0 0.0
        %457 = vmatprep.subr.mxu0 0.0
        %458 = vmatpush1.msra.mxu0 0.0
        %459 = vmatprep.mubr.f32.mxu0 0.0
        %460 = vmatmul.mubr.f32.gmra.mrb[0].mxu0 %v297
        %v461 = vpop.f32.mrb[0].mxu0
        %v462 = vadd.f32 %v378, %v461
        %v463 = vpop.f32.mrb[0].mxu0
        %v464 = vadd.f32 %v382, %v463
        %465 = vmatprep.mubr.f32.mxu0 0.0
        %466 = vmatmul.mubr.f32.gmra.mrb[0].mxu0 %v298
        %v467 = vpop.f32.mrb[0].mxu0
        %v468 = vadd.f32 %v378, %v467
        %v469 = vpop.f32.mrb[0].mxu0
        %v470 = vadd.f32 %v382, %v469
        %471 = vdwg.mxu0
        %472 = vmatprep.subr.mxu0 %v312
        %473 = vmatpush1.msra.mxu0 %v311
        %474 = vmatprep.subr.mxu0 %v316
        %475 = vmatpush1.msra.mxu0 %v315
        %476 = vmatprep.subr.mxu0 %v320
        %477 = vmatpush1.msra.mxu0 %v319
        %478 = vmatprep.subr.mxu0 %v324
        %479 = vmatpush1.msra.mxu0 %v323
        %480 = vmatprep.subr.mxu0 %v328
        %481 = vmatpush1.msra.mxu0 %v327
        %482 = vmatprep.subr.mxu0 %v332
        %483 = vmatpush1.msra.mxu0 %v331
        %484 = vmatprep.subr.mxu0 %v336
        %485 = vmatpush1.msra.mxu0 %v335
        %486 = vmatprep.subr.mxu0 %v340
        %487 = vmatpush1.msra.mxu0 %v339
        %488 = vmatprep.subr.mxu0 %v344
        %489 = vmatpush1.msra.mxu0 %v343
        %490 = vmatprep.subr.mxu0 %v348
        %491 = vmatpush1.msra.mxu0 %v347
        %492 = vmatprep.subr.mxu0 %v352
        %493 = vmatpush1.msra.mxu0 %v351
        %494 = vmatprep.subr.mxu0 %v356
        %495 = vmatpush1.msra.mxu0 %v355
        %496 = vmatprep.subr.mxu0 %v360
        %497 = vmatpush1.msra.mxu0 %v359
        %498 = vmatprep.subr.mxu0 %v364
        %499 = vmatpush1.msra.mxu0 %v363
        %500 = vmatprep.subr.mxu0 %v368
        %501 = vmatpush1.msra.mxu0 %v367
        %502 = vmatprep.subr.mxu0 %v372
        %503 = vmatpush1.msra.mxu0 %v371
        %504 = vmatprep.subr.mxu0 0.0
        %505 = vmatpush1.msra.mxu0 0.0
        %506 = vmatprep.subr.mxu0 0.0
        %507 = vmatpush1.msra.mxu0 0.0
        %508 = vmatprep.subr.mxu0 0.0
        %509 = vmatpush1.msra.mxu0 0.0
        %510 = vmatprep.subr.mxu0 0.0
        %511 = vmatpush1.msra.mxu0 0.0
        %512 = vmatprep.subr.mxu0 0.0
        %513 = vmatpush1.msra.mxu0 0.0
        %514 = vmatprep.subr.mxu0 0.0
        %515 = vmatpush1.msra.mxu0 0.0
        %516 = vmatprep.subr.mxu0 0.0
        %517 = vmatpush1.msra.mxu0 0.0
        %518 = vmatprep.subr.mxu0 0.0
        %519 = vmatpush1.msra.mxu0 0.0
        %520 = vmatprep.subr.mxu0 0.0
        %521 = vmatpush1.msra.mxu0 0.0
        %522 = vmatprep.subr.mxu0 0.0
        %523 = vmatpush1.msra.mxu0 0.0
        %524 = vmatprep.subr.mxu0 0.0
        %525 = vmatpush1.msra.mxu0 0.0
        %526 = vmatprep.subr.mxu0 0.0
        %527 = vmatpush1.msra.mxu0 0.0
        %528 = vmatprep.subr.mxu0 0.0
        %529 = vmatpush1.msra.mxu0 0.0
        %530 = vmatprep.subr.mxu0 0.0
        %531 = vmatpush1.msra.mxu0 0.0
        %532 = vmatprep.subr.mxu0 0.0
        %533 = vmatpush1.msra.mxu0 0.0
        %534 = vmatprep.subr.mxu0 0.0
        %535 = vmatpush1.msra.mxu0 0.0
        %536 = vmatprep.mubr.f32.mxu0 0.0
        %537 = vmatmul.mubr.f32.gmra.mrb[0].mxu0 %v297
        %v538 = vpop.f32.mrb[0].mxu0
        %v539 = vadd.f32 %v386, %v538
        %v540 = vpop.f32.mrb[0].mxu0
        %v541 = vadd.f32 %v390, %v540
        %542 = vmatprep.mubr.f32.mxu0 0.0
        %543 = vmatmul.mubr.f32.gmra.mrb[0].mxu0 %v298
        %v544 = vpop.f32.mrb[0].mxu0
        %v545 = vadd.f32 %v386, %v544
        %v546 = vpop.f32.mrb[0].mxu0
        %v547 = vadd.f32 %v390, %v546
        %548 = vdwg.mxu0
        %549 = vmatprep.subr.mxu0 0.0
        %550 = vmatpush1.xpose.msra.mxu0 %v464
        %551 = vmatprep.subr.mxu0 0.0
        %552 = vmatpush1.xpose.msra.mxu0 %v470
        %553 = vmatprep.subr.mxu0 0.0
        %554 = vmatpush1.xpose.msra.mxu0 0.0
        %555 = vmatprep.subr.mxu0 0.0
        %556 = vmatpush1.xpose.msra.mxu0 0.0
        %557 = vmatprep.subr.mxu0 0.0
        %558 = vmatpush1.xpose.msra.mxu0 0.0
        %559 = vmatprep.subr.mxu0 0.0
        %560 = vmatpush1.xpose.msra.mxu0 0.0
        %561 = vmatprep.subr.mxu0 0.0
        %562 = vmatpush1.xpose.msra.mxu0 0.0
        %563 = vmatprep.subr.mxu0 0.0
        %564 = vmatpush1.xpose.msra.mxu0 0.0
        %565 = vmatprep.subr.mxu0 0.0
        %566 = vmatpush1.xpose.msra.mxu0 0.0
        %567 = vmatprep.subr.mxu0 0.0
        %568 = vmatpush1.xpose.msra.mxu0 0.0
        %569 = vmatprep.subr.mxu0 0.0
        %570 = vmatpush1.xpose.msra.mxu0 0.0
        %571 = vmatprep.subr.mxu0 0.0
        %572 = vmatpush1.xpose.msra.mxu0 0.0
        %573 = vmatprep.subr.mxu0 0.0
        %574 = vmatpush1.xpose.msra.mxu0 0.0
        %575 = vmatprep.subr.mxu0 0.0
        %576 = vmatpush1.xpose.msra.mxu0 0.0
        %577 = vmatprep.subr.mxu0 0.0
        %578 = vmatpush1.xpose.msra.mxu0 0.0
        %579 = vmatprep.subr.mxu0 0.0
        %580 = vmatpush1.xpose.msra.mxu0 0.0
        %581 = vmatprep.subr.mxu0 0.0
        %582 = vmatpush1.xpose.msra.mxu0 0.0
        %583 = vmatprep.subr.mxu0 0.0
        %584 = vmatpush1.xpose.msra.mxu0 0.0
        %585 = vmatprep.subr.mxu0 0.0
        %586 = vmatpush1.xpose.msra.mxu0 0.0
        %587 = vmatprep.subr.mxu0 0.0
        %588 = vmatpush1.xpose.msra.mxu0 0.0
        %589 = vmatprep.subr.mxu0 0.0
        %590 = vmatpush1.xpose.msra.mxu0 0.0
        %591 = vmatprep.subr.mxu0 0.0
        %592 = vmatpush1.xpose.msra.mxu0 0.0
        %593 = vmatprep.subr.mxu0 0.0
        %594 = vmatpush1.xpose.msra.mxu0 0.0
        %595 = vmatprep.subr.mxu0 0.0
        %596 = vmatpush1.xpose.msra.mxu0 0.0
        %597 = vmatprep.subr.mxu0 0.0
        %598 = vmatpush1.xpose.msra.mxu0 0.0
        %599 = vmatprep.subr.mxu0 0.0
        %600 = vmatpush1.xpose.msra.mxu0 0.0
        %601 = vmatprep.subr.mxu0 0.0
        %602 = vmatpush1.xpose.msra.mxu0 0.0
        %603 = vmatprep.subr.mxu0 0.0
        %604 = vmatpush1.xpose.msra.mxu0 0.0
        %605 = vmatprep.subr.mxu0 0.0
        %606 = vmatpush1.xpose.msra.mxu0 0.0
        %607 = vmatprep.subr.mxu0 0.0
        %608 = vmatpush1.xpose.msra.mxu0 0.0
        %609 = vmatprep.subr.mxu0 0.0
        %610 = vmatpush1.xpose.msra.mxu0 0.0
        %611 = vmatprep.subr.mxu0 0.0
        %612 = vmatpush1.xpose.msra.mxu0 0.0
        %613 = vmatprep.mubr.f32.mxu0 0.0
        %614 = vmatmul.mubr.f32.gmra.mrb[0].mxu0 %v462
        %v615 = vpop.f32.mrb[0].mxu0
        %v616 = vadd.f32 %v307, %v615
        %v617 = vpop.f32.mrb[0].mxu0
        %618 = vmatprep.mubr.f32.mxu0 0.0
        %619 = vmatmul.mubr.f32.gmra.mrb[0].mxu0 %v468
        %v620 = vpop.f32.mrb[0].mxu0
        %v621 = vadd.f32 %v308, %v620
        %v622 = vpop.f32.mrb[0].mxu0
        %623 = vdwg.mxu0
        %vm624 = vcmask 130048
        %v625 = vsel %vm624, %v616, -inf
        %626 = vmax.xlane.f32.xlu0 %v625
        %v627 = vpop.xlane.xlu0 %626
        %v628 = vsel %vm624, %v621, -inf
        %629 = vmax.xlane.f32.xlu0 %v628
        %v630 = vpop.xlane.xlu0 %629
        %v631 = vsub.f32 %v616, %v627
        %v632 = vsub.f32 %v621, %v630
        %v633 = vmul.f32 %v631, 1.442695
        %v634 = vpow.pop %v633
        %v635 = vmul.f32 %v632, 1.442695
        %v636 = vpow.pop %v635
        %v637 = vmul.f32 %v634, %v303
        %v638 = vmul.f32 %v636, %v304
        %v639 = vsel %vm624, %v637, 0.0
        %640 = vadd.xlane.f32.xlu0 %v639
        %v641 = vpop.xlane.xlu0 %640
        %v642 = vsel %vm624, %v638, 0.0
        %643 = vadd.xlane.f32.xlu0 %v642
        %v644 = vpop.xlane.xlu0 %643
        %vm645 = vcmp.gt.f32.partialorder %v641, 0.0
        %vm646 = vcmp.gt.f32.partialorder %v644, 0.0
        %v647 = vsel %vm645, %v641, 1.0
        %v648 = vsel %vm646, %v644, 1.0
        %v649 = vrcp.pop %v647
        %v650 = vrcp.pop %v648
        %v651 = vmul.f32 %v637, %v649
        %v652 = vmul.f32 %v638, %v650
        %v654 = vsel %vm624, %v651, 0
        %v657 = vsel %vm624, %v652, 0
        %659 = vmatprep.subr.mxu0 0.0
        %660 = vmatpush1.msra.mxu0 %v539
        %661 = vmatprep.subr.mxu0 0.0
        %662 = vmatpush1.msra.mxu0 %v545
        %663 = vmatprep.subr.mxu0 0.0
        %664 = vmatpush1.msra.mxu0 0.0
        %665 = vmatprep.subr.mxu0 0.0
        %666 = vmatpush1.msra.mxu0 0.0
        %667 = vmatprep.subr.mxu0 0.0
        %668 = vmatpush1.msra.mxu0 0.0
        %669 = vmatprep.subr.mxu0 0.0
        %670 = vmatpush1.msra.mxu0 0.0
        %671 = vmatprep.subr.mxu0 0.0
        %672 = vmatpush1.msra.mxu0 0.0
        %673 = vmatprep.subr.mxu0 0.0
        %674 = vmatpush1.msra.mxu0 0.0
        %675 = vmatprep.subr.mxu0 0.0
        %676 = vmatpush1.msra.mxu0 0.0
        %677 = vmatprep.subr.mxu0 0.0
        %678 = vmatpush1.msra.mxu0 0.0
        %679 = vmatprep.subr.mxu0 0.0
        %680 = vmatpush1.msra.mxu0 0.0
        %681 = vmatprep.subr.mxu0 0.0
        %682 = vmatpush1.msra.mxu0 0.0
        %683 = vmatprep.subr.mxu0 0.0
        %684 = vmatpush1.msra.mxu0 0.0
        %685 = vmatprep.subr.mxu0 0.0
        %686 = vmatpush1.msra.mxu0 0.0
        %687 = vmatprep.subr.mxu0 0.0
        %688 = vmatpush1.msra.mxu0 0.0
        %689 = vmatprep.subr.mxu0 0.0
        %690 = vmatpush1.msra.mxu0 0.0
        %691 = vmatprep.subr.mxu0 0.0
        %692 = vmatpush1.msra.mxu0 0.0
        %693 = vmatprep.subr.mxu0 0.0
        %694 = vmatpush1.msra.mxu0 0.0
        %695 = vmatprep.subr.mxu0 0.0
        %696 = vmatpush1.msra.mxu0 0.0
        %697 = vmatprep.subr.mxu0 0.0
        %698 = vmatpush1.msra.mxu0 0.0
        %699 = vmatprep.subr.mxu0 0.0
        %700 = vmatpush1.msra.mxu0 0.0
        %701 = vmatprep.subr.mxu0 0.0
        %702 = vmatpush1.msra.mxu0 0.0
        %703 = vmatprep.subr.mxu0 0.0
        %704 = vmatpush1.msra.mxu0 0.0
        %705 = vmatprep.subr.mxu0 0.0
        %706 = vmatpush1.msra.mxu0 0.0
        %707 = vmatprep.subr.mxu0 0.0
        %708 = vmatpush1.msra.mxu0 0.0
        %709 = vmatprep.subr.mxu0 0.0
        %710 = vmatpush1.msra.mxu0 0.0
        %711 = vmatprep.subr.mxu0 0.0
        %712 = vmatpush1.msra.mxu0 0.0
        %713 = vmatprep.subr.mxu0 0.0
        %714 = vmatpush1.msra.mxu0 0.0
        %715 = vmatprep.subr.mxu0 0.0
        %716 = vmatpush1.msra.mxu0 0.0
        %717 = vmatprep.subr.mxu0 0.0
        %718 = vmatpush1.msra.mxu0 0.0
        %719 = vmatprep.subr.mxu0 0.0
        %720 = vmatpush1.msra.mxu0 0.0
        %721 = vmatprep.subr.mxu0 0.0
        %722 = vmatpush1.msra.mxu0 0.0
        %723 = vmatprep.mubr.f32.mxu0 0.0
        %724 = vmatmul.mubr.f32.gmra.mrb[0].mxu0 %v654
        %v725 = vpop.f32.mrb[0].mxu0
        %v726 = vadd.f32 %v541, %v725
        %v727 = vpop.f32.mrb[0].mxu0
        %728 = vmatprep.mubr.f32.mxu0 0.0
        %729 = vmatmul.mubr.f32.gmra.mrb[0].mxu0 %v657
        %v730 = vpop.f32.mrb[0].mxu0
        %v731 = vadd.f32 %v547, %v730
        %v732 = vpop.f32.mrb[0].mxu0
        %733 = vdwg.mxu0
        %v734 = vld [vmem:[%s4] sm:$0x3]
        %v735 = vadd.f32 %v726, %v731
        %736 = vadd.xlane.f32.xlu0 %v735
        %v737 = vpop.xlane.xlu0 %736
        %v738 = vrot.slane %v737, 4
        %v739 = vadd.f32 %v737, %v738
        %v740 = vrot.slane %v739, 2
        %v741 = vadd.f32 %v739, %v740
        %v742 = vrot.slane %v741, 1
        %v743 = vadd.f32 %v741, %v742
        %s744 = vtos %v743
        %s745 = smul.f32 %s744, 0.001953125
        %v746 = vmul.f32 %v726, %v726
        %v747 = vmul.f32 %v731, %v731
        %v748 = vadd.f32 %v746, %v747
        %749 = vadd.xlane.f32.xlu0 %v748
        %v750 = vpop.xlane.xlu0 %749
        %v751 = vrot.slane %v750, 4
        %v752 = vadd.f32 %v750, %v751
        %v753 = vrot.slane %v752, 2
        %v754 = vadd.f32 %v752, %v753
        %v755 = vrot.slane %v754, 1
        %v756 = vadd.f32 %v754, %v755
        %s757 = vtos %v756
        %s758 = smul.f32 %s757, 0.001953125
        %s759 = smul.f32 %s745, %s745
        %s760 = ssub.f32 %s758, %s759
        %s761 = smax.f32 %s760, 0.0
        %v762 = vstv %s761
        %v763 = vrsqrt.pop %v762
        %v764 = vmul.f32 %v762, %v763
        %vm765 = vcmp.eq.f32.partialorder %v762, inf
        %v766 = vsel %vm765, %v762, %v764
        %vm767 = vcmp.eq.f32.partialorder %v762, 0.0
        %v768 = vand.u32 %v762, 2147483648
        %v769 = vsel %vm767, %v768, %v766
        %s770 = vtos %v769
        %s771 = sadd.f32 %s770, 1e-05
        %v772 = vstv %s771
        %v773 = vrcp.pop %v772
        %s774 = vtos %v773
        %v775 = vstv %s745
        %v776 = vsub.f32 %v726, %v775
        %v777 = vsub.f32 %v731, %v775
        %v778 = vstv %s774
        %v779 = vmul.f32 %v734, %v778
        %v780 = vlaneseq
        %v781 = vshrl.u32 %v780, 7
        %v782 = vsub.s32 0, %v781
        %v783 = vrot.slane %v779, %v782
        %v784 = vmul.f32 %v776, %v783
        %v785 = vmul.f32 %v777, %v783
        %v786 = vlaneseq
        %v787 = vshrl.u32 %v786, 7
        %v788 = vsub.s32 1, %v787
        %v789 = vrot.slane %v734, %v788
        %v790 = vadd.f32 %v784, %v789
        %v791 = vadd.f32 %v785, %v789
        %v792 = vmax.f32 %v790, 0.0
        %v793 = vmax.f32 %v791, 0.0
        %v794 = vadd.f32 %v792, %v297
        %v795 = vadd.f32 %v793, %v298
        %s796 = scalar_lea.vmem [#allocation7], 512
        %v797 = vld [vmem:[%s796] sm:$0xff]
        %v798 = vld [vmem:[%s796 + $0x8] sm:$0xff]
        %v799 = vld [vmem:[%s796 + $0x10] sm:$0xff]
        %v800 = vld [vmem:[%s796 + $0x18] sm:$0xff]
        %v801 = vld [vmem:[%s796 + $0x20] sm:$0xff]
        %v802 = vld [vmem:[%s796 + $0x28] sm:$0xff]
        %v803 = vld [vmem:[%s796 + $0x30] sm:$0xff]
        %v804 = vld [vmem:[%s796 + $0x38] sm:$0xff]
        %v805 = vld [vmem:[%s796 + $0x40] sm:$0xff]
        %v806 = vld [vmem:[%s796 + $0x48] sm:$0xff]
        %v807 = vld [vmem:[%s796 + $0x50] sm:$0xff]
        %v808 = vld [vmem:[%s796 + $0x58] sm:$0xff]
        %v809 = vld [vmem:[%s796 + $0x60] sm:$0xff]
        %v810 = vld [vmem:[%s796 + $0x68] sm:$0xff]
        %v811 = vld [vmem:[%s796 + $0x70] sm:$0xff]
        %v812 = vld [vmem:[%s796 + $0x78] sm:$0xff]
        %v813 = vld [vmem:[%s796 + $0x80] sm:$0xff]
        %v814 = vld [vmem:[%s796 + $0x88] sm:$0xff]
        %v815 = vld [vmem:[%s796 + $0x90] sm:$0xff]
        %v816 = vld [vmem:[%s796 + $0x98] sm:$0xff]
        %v817 = vld [vmem:[%s796 + $0xa0] sm:$0xff]
        %v818 = vld [vmem:[%s796 + $0xa8] sm:$0xff]
        %v819 = vld [vmem:[%s796 + $0xb0] sm:$0xff]
        %v820 = vld [vmem:[%s796 + $0xb8] sm:$0xff]
        %v821 = vld [vmem:[%s796 + $0xc0] sm:$0xff]
        %v822 = vld [vmem:[%s796 + $0xc8] sm:$0xff]
        %v823 = vld [vmem:[%s796 + $0xd0] sm:$0xff]
        %v824 = vld [vmem:[%s796 + $0xd8] sm:$0xff]
        %v825 = vld [vmem:[%s796 + $0xe0] sm:$0xff]
        %v826 = vld [vmem:[%s796 + $0xe8] sm:$0xff]
        %v827 = vld [vmem:[%s796 + $0xf0] sm:$0xff]
        %v828 = vld [vmem:[%s796 + $0xf8] sm:$0xff]
        %v829 = vld [vmem:[%s796 + $0x100] sm:$0xff]
        %v830 = vld [vmem:[%s796 + $0x108] sm:$0xff]
        %v831 = vld [vmem:[%s796 + $0x110] sm:$0xff]
        %v832 = vld [vmem:[%s796 + $0x118] sm:$0xff]
        %v833 = vld [vmem:[%s796 + $0x120] sm:$0xff]
        %v834 = vld [vmem:[%s796 + $0x128] sm:$0xff]
        %v835 = vld [vmem:[%s796 + $0x130] sm:$0xff]
        %v836 = vld [vmem:[%s796 + $0x138] sm:$0xff]
        %v837 = vld [vmem:[%s796 + $0x140] sm:$0xff]
        %v838 = vld [vmem:[%s796 + $0x148] sm:$0xff]
        %v839 = vld [vmem:[%s796 + $0x150] sm:$0xff]
        %v840 = vld [vmem:[%s796 + $0x158] sm:$0xff]
        %v841 = vld [vmem:[%s796 + $0x160] sm:$0xff]
        %v842 = vld [vmem:[%s796 + $0x168] sm:$0xff]
        %v843 = vld [vmem:[%s796 + $0x170] sm:$0xff]
        %v844 = vld [vmem:[%s796 + $0x178] sm:$0xff]
        %v845 = vld [vmem:[%s796 + $0x180] sm:$0xff]
        %v846 = vld [vmem:[%s796 + $0x188] sm:$0xff]
        %v847 = vld [vmem:[%s796 + $0x190] sm:$0xff]
        %v848 = vld [vmem:[%s796 + $0x198] sm:$0xff]
        %v849 = vld [vmem:[%s796 + $0x1a0] sm:$0xff]
        %v850 = vld [vmem:[%s796 + $0x1a8] sm:$0xff]
        %v851 = vld [vmem:[%s796 + $0x1b0] sm:$0xff]
        %v852 = vld [vmem:[%s796 + $0x1b8] sm:$0xff]
        %v853 = vld [vmem:[%s796 + $0x1c0] sm:$0xff]
        %v854 = vld [vmem:[%s796 + $0x1c8] sm:$0xff]
        %v855 = vld [vmem:[%s796 + $0x1d0] sm:$0xff]
        %v856 = vld [vmem:[%s796 + $0x1d8] sm:$0xff]
        %v857 = vld [vmem:[%s796 + $0x1e0] sm:$0xff]
        %v858 = vld [vmem:[%s796 + $0x1e8] sm:$0xff]
        %v859 = vld [vmem:[%s796 + $0x1f0] sm:$0xff]
        %v860 = vld [vmem:[%s796 + $0x1f8] sm:$0xff]
        %s861 = scalar_lea.vmem %s3, 4
        %v862 = vld [vmem:[%s861] sm:$0xf]
        %v864 = vlaneseq
        %v865 = vshrl.u32 %v864, 7
        %v866 = vsub.s32 0, %v865
        %v867 = vrot.slane %v862, %v866
        %v868 = vlaneseq
        %v869 = vshrl.u32 %v868, 7
        %v870 = vsub.s32 1, %v869
        %v871 = vrot.slane %v862, %v870
        %v872 = vlaneseq
        %v873 = vshrl.u32 %v872, 7
        %v874 = vsub.s32 2, %v873
        %v875 = vrot.slane %v862, %v874
        %v876 = vlaneseq
        %v877 = vshrl.u32 %v876, 7
        %v878 = vsub.s32 3, %v877
        %v879 = vrot.slane %v862, %v878
        %884 = vmatprep.subr.mxu0 %v798
        %885 = vmatpush1.msra.mxu0 %v797
        %886 = vmatprep.subr.mxu0 %v802
        %887 = vmatpush1.msra.mxu0 %v801
        %888 = vmatprep.subr.mxu0 %v806
        %889 = vmatpush1.msra.mxu0 %v805
        %890 = vmatprep.subr.mxu0 %v810
        %891 = vmatpush1.msra.mxu0 %v809
        %892 = vmatprep.subr.mxu0 %v814
        %893 = vmatpush1.msra.mxu0 %v813
        %894 = vmatprep.subr.mxu0 %v818
        %895 = vmatpush1.msra.mxu0 %v817
        %896 = vmatprep.subr.mxu0 %v822
        %897 = vmatpush1.msra.mxu0 %v821
        %898 = vmatprep.subr.mxu0 %v826
        %899 = vmatpush1.msra.mxu0 %v825
        %900 = vmatprep.subr.mxu0 %v830
        %901 = vmatpush1.msra.mxu0 %v829
        %902 = vmatprep.subr.mxu0 %v834
        %903 = vmatpush1.msra.mxu0 %v833
        %904 = vmatprep.subr.mxu0 %v838
        %905 = vmatpush1.msra.mxu0 %v837
        %906 = vmatprep.subr.mxu0 %v842
        %907 = vmatpush1.msra.mxu0 %v841
        %908 = vmatprep.subr.mxu0 %v846
        %909 = vmatpush1.msra.mxu0 %v845
        %910 = vmatprep.subr.mxu0 %v850
        %911 = vmatpush1.msra.mxu0 %v849
        %912 = vmatprep.subr.mxu0 %v854
        %913 = vmatpush1.msra.mxu0 %v853
        %914 = vmatprep.subr.mxu0 %v858
        %915 = vmatpush1.msra.mxu0 %v857
        %916 = vmatprep.subr.mxu0 0.0
        %917 = vmatpush1.msra.mxu0 0.0
        %918 = vmatprep.subr.mxu0 0.0
        %919 = vmatpush1.msra.mxu0 0.0
        %920 = vmatprep.subr.mxu0 0.0
        %921 = vmatpush1.msra.mxu0 0.0
        %922 = vmatprep.subr.mxu0 0.0
        %923 = vmatpush1.msra.mxu0 0.0
        %924 = vmatprep.subr.mxu0 0.0
        %925 = vmatpush1.msra.mxu0 0.0
        %926 = vmatprep.subr.mxu0 0.0
        %927 = vmatpush1.msra.mxu0 0.0
        %928 = vmatprep.subr.mxu0 0.0
        %929 = vmatpush1.msra.mxu0 0.0
        %930 = vmatprep.subr.mxu0 0.0
        %931 = vmatpush1.msra.mxu0 0.0
        %932 = vmatprep.subr.mxu0 0.0
        %933 = vmatpush1.msra.mxu0 0.0
        %934 = vmatprep.subr.mxu0 0.0
        %935 = vmatpush1.msra.mxu0 0.0
        %936 = vmatprep.subr.mxu0 0.0
        %937 = vmatpush1.msra.mxu0 0.0
        %938 = vmatprep.subr.mxu0 0.0
        %939 = vmatpush1.msra.mxu0 0.0
        %940 = vmatprep.subr.mxu0 0.0
        %941 = vmatpush1.msra.mxu0 0.0
        %942 = vmatprep.subr.mxu0 0.0
        %943 = vmatpush1.msra.mxu0 0.0
        %944 = vmatprep.subr.mxu0 0.0
        %945 = vmatpush1.msra.mxu0 0.0
        %946 = vmatprep.subr.mxu0 0.0
        %947 = vmatpush1.msra.mxu0 0.0
        %948 = vmatprep.mubr.f32.mxu0 0.0
        %949 = vmatmul.mubr.f32.gmra.mrb[0].mxu0 %v794
        %v950 = vpop.f32.mrb[0].mxu0
        %v951 = vadd.f32 %v867, %v950
        %v952 = vpop.f32.mrb[0].mxu0
        %v953 = vadd.f32 %v871, %v952
        %954 = vmatprep.mubr.f32.mxu0 0.0
        %955 = vmatmul.mubr.f32.gmra.mrb[0].mxu0 %v795
        %v956 = vpop.f32.mrb[0].mxu0
        %v957 = vadd.f32 %v867, %v956
        %v958 = vpop.f32.mrb[0].mxu0
        %v959 = vadd.f32 %v871, %v958
        %960 = vdwg.mxu0
        %961 = vmatprep.subr.mxu0 %v800
        %962 = vmatpush1.msra.mxu0 %v799
        %963 = vmatprep.subr.mxu0 %v804
        %964 = vmatpush1.msra.mxu0 %v803
        %965 = vmatprep.subr.mxu0 %v808
        %966 = vmatpush1.msra.mxu0 %v807
        %967 = vmatprep.subr.mxu0 %v812
        %968 = vmatpush1.msra.mxu0 %v811
        %969 = vmatprep.subr.mxu0 %v816
        %970 = vmatpush1.msra.mxu0 %v815
        %971 = vmatprep.subr.mxu0 %v820
        %972 = vmatpush1.msra.mxu0 %v819
        %973 = vmatprep.subr.mxu0 %v824
        %974 = vmatpush1.msra.mxu0 %v823
        %975 = vmatprep.subr.mxu0 %v828
        %976 = vmatpush1.msra.mxu0 %v827
        %977 = vmatprep.subr.mxu0 %v832
        %978 = vmatpush1.msra.mxu0 %v831
        %979 = vmatprep.subr.mxu0 %v836
        %980 = vmatpush1.msra.mxu0 %v835
        %981 = vmatprep.subr.mxu0 %v840
        %982 = vmatpush1.msra.mxu0 %v839
        %983 = vmatprep.subr.mxu0 %v844
        %984 = vmatpush1.msra.mxu0 %v843
        %985 = vmatprep.subr.mxu0 %v848
        %986 = vmatpush1.msra.mxu0 %v847
        %987 = vmatprep.subr.mxu0 %v852
        %988 = vmatpush1.msra.mxu0 %v851
        %989 = vmatprep.subr.mxu0 %v856
        %990 = vmatpush1.msra.mxu0 %v855
        %991 = vmatprep.subr.mxu0 %v860
        %992 = vmatpush1.msra.mxu0 %v859
        %993 = vmatprep.subr.mxu0 0.0
        %994 = vmatpush1.msra.mxu0 0.0
        %995 = vmatprep.subr.mxu0 0.0
        %996 = vmatpush1.msra.mxu0 0.0
        %997 = vmatprep.subr.mxu0 0.0
        %998 = vmatpush1.msra.mxu0 0.0
        %999 = vmatprep.subr.mxu0 0.0
        %1000 = vmatpush1.msra.mxu0 0.0
        %1001 = vmatprep.subr.mxu0 0.0
        %1002 = vmatpush1.msra.mxu0 0.0
        %1003 = vmatprep.subr.mxu0 0.0
        %1004 = vmatpush1.msra.mxu0 0.0
        %1005 = vmatprep.subr.mxu0 0.0
        %1006 = vmatpush1.msra.mxu0 0.0
        %1007 = vmatprep.subr.mxu0 0.0
        %1008 = vmatpush1.msra.mxu0 0.0
        %1009 = vmatprep.subr.mxu0 0.0
        %1010 = vmatpush1.msra.mxu0 0.0
        %1011 = vmatprep.subr.mxu0 0.0
        %1012 = vmatpush1.msra.mxu0 0.0
        %1013 = vmatprep.subr.mxu0 0.0
        %1014 = vmatpush1.msra.mxu0 0.0
        %1015 = vmatprep.subr.mxu0 0.0
        %1016 = vmatpush1.msra.mxu0 0.0
        %1017 = vmatprep.subr.mxu0 0.0
        %1018 = vmatpush1.msra.mxu0 0.0
        %1019 = vmatprep.subr.mxu0 0.0
        %1020 = vmatpush1.msra.mxu0 0.0
        %1021 = vmatprep.subr.mxu0 0.0
        %1022 = vmatpush1.msra.mxu0 0.0
        %1023 = vmatprep.subr.mxu0 0.0
        %1024 = vmatpush1.msra.mxu0 0.0
        %1025 = vmatprep.mubr.f32.mxu0 0.0
        %1026 = vmatmul.mubr.f32.gmra.mrb[0].mxu0 %v794
        %v1027 = vpop.f32.mrb[0].mxu0
        %v1028 = vadd.f32 %v875, %v1027
        %v1029 = vpop.f32.mrb[0].mxu0
        %v1030 = vadd.f32 %v879, %v1029
        %1031 = vmatprep.mubr.f32.mxu0 0.0
        %1032 = vmatmul.mubr.f32.gmra.mrb[0].mxu0 %v795
        %v1033 = vpop.f32.mrb[0].mxu0
        %v1034 = vadd.f32 %v875, %v1033
        %v1035 = vpop.f32.mrb[0].mxu0
        %v1036 = vadd.f32 %v879, %v1035
        %1037 = vdwg.mxu0
        %1038 = vmatprep.subr.mxu0 0.0
        %1039 = vmatpush1.xpose.msra.mxu0 %v953
        %1040 = vmatprep.subr.mxu0 0.0
        %1041 = vmatpush1.xpose.msra.mxu0 %v959
        %1042 = vmatprep.subr.mxu0 0.0
        %1043 = vmatpush1.xpose.msra.mxu0 0.0
        %1044 = vmatprep.subr.mxu0 0.0
        %1045 = vmatpush1.xpose.msra.mxu0 0.0
        %1046 = vmatprep.subr.mxu0 0.0
        %1047 = vmatpush1.xpose.msra.mxu0 0.0
        %1048 = vmatprep.subr.mxu0 0.0
        %1049 = vmatpush1.xpose.msra.mxu0 0.0
        %1050 = vmatprep.subr.mxu0 0.0
        %1051 = vmatpush1.xpose.msra.mxu0 0.0
        %1052 = vmatprep.subr.mxu0 0.0
        %1053 = vmatpush1.xpose.msra.mxu0 0.0
        %1054 = vmatprep.subr.mxu0 0.0
        %1055 = vmatpush1.xpose.msra.mxu0 0.0
        %1056 = vmatprep.subr.mxu0 0.0
        %1057 = vmatpush1.xpose.msra.mxu0 0.0
        %1058 = vmatprep.subr.mxu0 0.0
        %1059 = vmatpush1.xpose.msra.mxu0 0.0
        %1060 = vmatprep.subr.mxu0 0.0
        %1061 = vmatpush1.xpose.msra.mxu0 0.0
        %1062 = vmatprep.subr.mxu0 0.0
        %1063 = vmatpush1.xpose.msra.mxu0 0.0
        %1064 = vmatprep.subr.mxu0 0.0
        %1065 = vmatpush1.xpose.msra.mxu0 0.0
        %1066 = vmatprep.subr.mxu0 0.0
        %1067 = vmatpush1.xpose.msra.mxu0 0.0
        %1068 = vmatprep.subr.mxu0 0.0
        %1069 = vmatpush1.xpose.msra.mxu0 0.0
        %1070 = vmatprep.subr.mxu0 0.0
        %1071 = vmatpush1.xpose.msra.mxu0 0.0
        %1072 = vmatprep.subr.mxu0 0.0
        %1073 = vmatpush1.xpose.msra.mxu0 0.0
        %1074 = vmatprep.subr.mxu0 0.0
        %1075 = vmatpush1.xpose.msra.mxu0 0.0
        %1076 = vmatprep.subr.mxu0 0.0
        %1077 = vmatpush1.xpose.msra.mxu0 0.0
        %1078 = vmatprep.subr.mxu0 0.0
        %1079 = vmatpush1.xpose.msra.mxu0 0.0
        %1080 = vmatprep.subr.mxu0 0.0
        %1081 = vmatpush1.xpose.msra.mxu0 0.0
        %1082 = vmatprep.subr.mxu0 0.0
        %1083 = vmatpush1.xpose.msra.mxu0 0.0
        %1084 = vmatprep.subr.mxu0 0.0
        %1085 = vmatpush1.xpose.msra.mxu0 0.0
        %1086 = vmatprep.subr.mxu0 0.0
        %1087 = vmatpush1.xpose.msra.mxu0 0.0
        %1088 = vmatprep.subr.mxu0 0.0
        %1089 = vmatpush1.xpose.msra.mxu0 0.0
        %1090 = vmatprep.subr.mxu0 0.0
        %1091 = vmatpush1.xpose.msra.mxu0 0.0
        %1092 = vmatprep.subr.mxu0 0.0
        %1093 = vmatpush1.xpose.msra.mxu0 0.0
        %1094 = vmatprep.subr.mxu0 0.0
        %1095 = vmatpush1.xpose.msra.mxu0 0.0
        %1096 = vmatprep.subr.mxu0 0.0
        %1097 = vmatpush1.xpose.msra.mxu0 0.0
        %1098 = vmatprep.subr.mxu0 0.0
        %1099 = vmatpush1.xpose.msra.mxu0 0.0
        %1100 = vmatprep.subr.mxu0 0.0
        %1101 = vmatpush1.xpose.msra.mxu0 0.0
        %1102 = vmatprep.mubr.f32.mxu0 0.0
        %1103 = vmatmul.mubr.f32.gmra.mrb[0].mxu0 %v951
        %v1104 = vpop.f32.mrb[0].mxu0
        %v1105 = vadd.f32 %v307, %v1104
        %v1106 = vpop.f32.mrb[0].mxu0
        %1107 = vmatprep.mubr.f32.mxu0 0.0
        %1108 = vmatmul.mubr.f32.gmra.mrb[0].mxu0 %v957
        %v1109 = vpop.f32.mrb[0].mxu0
        %v1110 = vadd.f32 %v308, %v1109
        %v1111 = vpop.f32.mrb[0].mxu0
        %1112 = vdwg.mxu0
        %v1113 = vsel %vm624, %v1105, -inf
        %1114 = vmax.xlane.f32.xlu0 %v1113
        %v1115 = vpop.xlane.xlu0 %1114
        %v1116 = vsel %vm624, %v1110, -inf
        %1117 = vmax.xlane.f32.xlu0 %v1116
        %v1118 = vpop.xlane.xlu0 %1117
        %v1119 = vsub.f32 %v1105, %v1115
        %v1120 = vsub.f32 %v1110, %v1118
        %v1121 = vmul.f32 %v1119, 1.442695
        %v1122 = vpow.pop %v1121
        %v1123 = vmul.f32 %v1120, 1.442695
        %v1124 = vpow.pop %v1123
        %v1125 = vmul.f32 %v1122, %v303
        %v1126 = vmul.f32 %v1124, %v304
        %v1127 = vsel %vm624, %v1125, 0.0
        %1128 = vadd.xlane.f32.xlu0 %v1127
        %v1129 = vpop.xlane.xlu0 %1128
        %v1130 = vsel %vm624, %v1126, 0.0
        %1131 = vadd.xlane.f32.xlu0 %v1130
        %v1132 = vpop.xlane.xlu0 %1131
        %vm1133 = vcmp.gt.f32.partialorder %v1129, 0.0
        %vm1134 = vcmp.gt.f32.partialorder %v1132, 0.0
        %v1135 = vsel %vm1133, %v1129, 1.0
        %v1136 = vsel %vm1134, %v1132, 1.0
        %v1137 = vrcp.pop %v1135
        %v1138 = vrcp.pop %v1136
        %v1139 = vmul.f32 %v1125, %v1137
        %v1140 = vmul.f32 %v1126, %v1138
        %v1142 = vsel %vm624, %v1139, 0
        %v1145 = vsel %vm624, %v1140, 0
        %1147 = vmatprep.subr.mxu0 0.0
        %1148 = vmatpush1.msra.mxu0 %v1028
        %1149 = vmatprep.subr.mxu0 0.0
        %1150 = vmatpush1.msra.mxu0 %v1034
        %1151 = vmatprep.subr.mxu0 0.0
        %1152 = vmatpush1.msra.mxu0 0.0
        %1153 = vmatprep.subr.mxu0 0.0
        %1154 = vmatpush1.msra.mxu0 0.0
        %1155 = vmatprep.subr.mxu0 0.0
        %1156 = vmatpush1.msra.mxu0 0.0
        %1157 = vmatprep.subr.mxu0 0.0
        %1158 = vmatpush1.msra.mxu0 0.0
        %1159 = vmatprep.subr.mxu0 0.0
        %1160 = vmatpush1.msra.mxu0 0.0
        %1161 = vmatprep.subr.mxu0 0.0
        %1162 = vmatpush1.msra.mxu0 0.0
        %1163 = vmatprep.subr.mxu0 0.0
        %1164 = vmatpush1.msra.mxu0 0.0
        %1165 = vmatprep.subr.mxu0 0.0
        %1166 = vmatpush1.msra.mxu0 0.0
        %1167 = vmatprep.subr.mxu0 0.0
        %1168 = vmatpush1.msra.mxu0 0.0
        %1169 = vmatprep.subr.mxu0 0.0
        %1170 = vmatpush1.msra.mxu0 0.0
        %1171 = vmatprep.subr.mxu0 0.0
        %1172 = vmatpush1.msra.mxu0 0.0
        %1173 = vmatprep.subr.mxu0 0.0
        %1174 = vmatpush1.msra.mxu0 0.0
        %1175 = vmatprep.subr.mxu0 0.0
        %1176 = vmatpush1.msra.mxu0 0.0
        %1177 = vmatprep.subr.mxu0 0.0
        %1178 = vmatpush1.msra.mxu0 0.0
        %1179 = vmatprep.subr.mxu0 0.0
        %1180 = vmatpush1.msra.mxu0 0.0
        %1181 = vmatprep.subr.mxu0 0.0
        %1182 = vmatpush1.msra.mxu0 0.0
        %1183 = vmatprep.subr.mxu0 0.0
        %1184 = vmatpush1.msra.mxu0 0.0
        %1185 = vmatprep.subr.mxu0 0.0
        %1186 = vmatpush1.msra.mxu0 0.0
        %1187 = vmatprep.subr.mxu0 0.0
        %1188 = vmatpush1.msra.mxu0 0.0
        %1189 = vmatprep.subr.mxu0 0.0
        %1190 = vmatpush1.msra.mxu0 0.0
        %1191 = vmatprep.subr.mxu0 0.0
        %1192 = vmatpush1.msra.mxu0 0.0
        %1193 = vmatprep.subr.mxu0 0.0
        %1194 = vmatpush1.msra.mxu0 0.0
        %1195 = vmatprep.subr.mxu0 0.0
        %1196 = vmatpush1.msra.mxu0 0.0
        %1197 = vmatprep.subr.mxu0 0.0
        %1198 = vmatpush1.msra.mxu0 0.0
        %1199 = vmatprep.subr.mxu0 0.0
        %1200 = vmatpush1.msra.mxu0 0.0
        %1201 = vmatprep.subr.mxu0 0.0
        %1202 = vmatpush1.msra.mxu0 0.0
        %1203 = vmatprep.subr.mxu0 0.0
        %1204 = vmatpush1.msra.mxu0 0.0
        %1205 = vmatprep.subr.mxu0 0.0
        %1206 = vmatpush1.msra.mxu0 0.0
        %1207 = vmatprep.subr.mxu0 0.0
        %1208 = vmatpush1.msra.mxu0 0.0
        %1209 = vmatprep.subr.mxu0 0.0
        %1210 = vmatpush1.msra.mxu0 0.0
        %1211 = vmatprep.mubr.f32.mxu0 0.0
        %1212 = vmatmul.mubr.f32.gmra.mrb[0].mxu0 %v1142
        %v1213 = vpop.f32.mrb[0].mxu0
        %v1214 = vadd.f32 %v1030, %v1213
        %v1215 = vpop.f32.mrb[0].mxu0
        %1216 = vmatprep.mubr.f32.mxu0 0.0
        %1217 = vmatmul.mubr.f32.gmra.mrb[0].mxu0 %v1145
        %v1218 = vpop.f32.mrb[0].mxu0
        %v1219 = vadd.f32 %v1036, %v1218
        %v1220 = vpop.f32.mrb[0].mxu0
        %1221 = vdwg.mxu0
        %s1222 = scalar_lea.vmem %s4, 2
        %v1223 = vld [vmem:[%s1222] sm:$0x3]
        %v1224 = vadd.f32 %v1214, %v1219
        %1225 = vadd.xlane.f32.xlu0 %v1224
        %v1226 = vpop.xlane.xlu0 %1225
        %v1227 = vrot.slane %v1226, 4
        %v1228 = vadd.f32 %v1226, %v1227
        %v1229 = vrot.slane %v1228, 2
        %v1230 = vadd.f32 %v1228, %v1229
        %v1231 = vrot.slane %v1230, 1
        %v1232 = vadd.f32 %v1230, %v1231
        %s1233 = vtos %v1232
        %s1234 = smul.f32 %s1233, 0.001953125
        %v1235 = vmul.f32 %v1214, %v1214
        %v1236 = vmul.f32 %v1219, %v1219
        %v1237 = vadd.f32 %v1235, %v1236
        %1238 = vadd.xlane.f32.xlu0 %v1237
        %v1239 = vpop.xlane.xlu0 %1238
        %v1240 = vrot.slane %v1239, 4
        %v1241 = vadd.f32 %v1239, %v1240
        %v1242 = vrot.slane %v1241, 2
        %v1243 = vadd.f32 %v1241, %v1242
        %v1244 = vrot.slane %v1243, 1
        %v1245 = vadd.f32 %v1243, %v1244
        %s1246 = vtos %v1245
        %s1247 = smul.f32 %s1246, 0.001953125
        %s1248 = smul.f32 %s1234, %s1234
        %s1249 = ssub.f32 %s1247, %s1248
        %s1250 = smax.f32 %s1249, 0.0
        %v1251 = vstv %s1250
        %v1252 = vrsqrt.pop %v1251
        %v1253 = vmul.f32 %v1251, %v1252
        %vm1254 = vcmp.eq.f32.partialorder %v1251, inf
        %v1255 = vsel %vm1254, %v1251, %v1253
        %vm1256 = vcmp.eq.f32.partialorder %v1251, 0.0
        %v1257 = vand.u32 %v1251, 2147483648
        %v1258 = vsel %vm1256, %v1257, %v1255
        %s1259 = vtos %v1258
        %s1260 = sadd.f32 %s1259, 1e-05
        %v1261 = vstv %s1260
        %v1262 = vrcp.pop %v1261
        %s1263 = vtos %v1262
        %v1264 = vstv %s1234
        %v1265 = vsub.f32 %v1214, %v1264
        %v1266 = vsub.f32 %v1219, %v1264
        %v1267 = vstv %s1263
        %v1268 = vmul.f32 %v1223, %v1267
        %v1269 = vlaneseq
        %v1270 = vshrl.u32 %v1269, 7
        %v1271 = vsub.s32 0, %v1270
        %v1272 = vrot.slane %v1268, %v1271
        %v1273 = vmul.f32 %v1265, %v1272
        %v1274 = vmul.f32 %v1266, %v1272
        %v1275 = vlaneseq
        %v1276 = vshrl.u32 %v1275, 7
        %v1277 = vsub.s32 1, %v1276
        %v1278 = vrot.slane %v1223, %v1277
        %v1279 = vadd.f32 %v1273, %v1278
        %v1280 = vadd.f32 %v1274, %v1278
        %v1281 = vmax.f32 %v1279, 0.0
        %v1282 = vmax.f32 %v1280, 0.0
        %v1283 = vadd.f32 %v1281, %v794
        %v1284 = vadd.f32 %v1282, %v795
        %1285 = vst [vmem:[%s296] sm:$0xff] %v1283
        %1286 = vst [vmem:[%s296 + $0x8] sm:$0xff] %v1284
        %s1287 = sand.u32 %s148, 1
        %s1288 = scalar_lea.sflag [#allocation4], %s1287
        %s1289 = sand.u32 %s148, 1
        %s1290 = smul.addr %s1289, 16
        %s1291 = scalar_lea.vmem [#allocation8], %s1290
        // Predicated region
        $region53: #{tpu_custom_call.1} parent=39 // pred_check
          %p1292 = pneg %p158
        $region54: #{tpu_custom_call.1} parent=39 // pred_check_branch
          %1294 = sbr.rel (%p1292) target = $region56
        $region55: #{tpu_custom_call.1} parent=39 // pred_region
          %s1296 = ssub.s32 256, 256
          %1297 = vsyncadd %s1288, %s1296
          %s1298 = smul.addr %s25, 2
          %s1299 = smul.addr %s1298, 128
          %s1300 = scalar_lea.hbm %s5, %s1299
          %s1301 = sshll.u32 %s1291, 4
          %s1302 = int_to_ptr.vmem [resolvable:$true] %s1301
          %1307 = dma.vmem_to_hbm [thread:$0]  %s1302, 256, %s1300, %s1288, 128, 128, 8
        $region56: #{tpu_custom_call.1} parent=39 // pred_fallthru
          _
      $region40: #{tpu_custom_call.1} parent=5 // pred_fallthru
        _
      %p1308 = scmp.le.s32.totalorder 2, %s20
      // Predicated region
      $region57: #{tpu_custom_call.1} parent=5 // pred_check
        %p1309 = pneg %p1308
      $region58: #{tpu_custom_call.1} parent=5 // pred_check_branch
        %1311 = sbr.rel (%p1309) target = $region60
      $region59: #{tpu_custom_call.1} parent=5 // pred_region
        %s1312 = ssub.s32 %s20, 2
        // Predicated region
        $region61: #{tpu_custom_call.1} parent=59 // pred_check
          %p1313 = pneg %p164
        $region62: #{tpu_custom_call.1} parent=59 // pred_check_branch
          %1315 = sbr.rel (%p1313) target = $region64
        $region63: #{tpu_custom_call.1} parent=59 // pred_region
          %s1316 = sand.u32 %s149, 1
          %s1317 = scalar_lea.sflag [#allocation4], %s1316
          %s1318 = sand.u32 %s149, 1
          %s1319 = smul.addr %s1318, 16
          %s1320 = scalar_lea.vmem [#allocation8], %s1319
          %1321 = dma.done %s1317, 256
        $region64: #{tpu_custom_call.1} parent=59 // pred_fallthru
          _
      $region60: #{tpu_custom_call.1} parent=5 // pred_fallthru
        _
    $region6: #{tpu_custom_call.1} parent=1 // loop_footer
      %s24 = sadd.s32 1, %s20
    $region7: #{tpu_custom_call.1} parent=1 // loop_footer_branch
      %19 = sbr.rel target = $region3
    $region8: #{tpu_custom_call.1} parent=1 // loop_exit
      _
    %1322 = vsyncpa [#allocation3], 1
    %s1323 = scalar_lea.sflag [#allocation3], 1
    %1324 = vsyncpa %s1323, 1
    %1325 = vsyncpa [#allocation6], 1
    %s1326 = scalar_lea.sflag [#allocation6], 1
    %1327 = vsyncpa %s1326, 1
    %1328 = vsyncpa [#allocation4], 1
    %s1329 = scalar_lea.sflag [#allocation4], 1
    %1330 = vsyncpa %s1329, 1

</llo_original>
